<compile_context>
chip_gen: v7x
topology: tpu7x:2x2x1
jax: 0.10.0
libtpu: 0.0.40
codegen_flags: <defaults>
</compile_context>

<pallas_src>
import itertools
import numpy as np

import jax
import jax.numpy as jnp
from jax.experimental import pallas as pl
from jax.experimental.pallas import tpu as pltpu


_VMEM_SPEC = pl.BlockSpec(memory_space=pltpu.MemorySpace.VMEM)


def _elu(x):
    # ELU(alpha=1): x if x > 0 else exp(x) - 1   (min() avoids exp overflow)
    return jnp.where(x > 0, x, jnp.exp(jnp.minimum(x, 0.0)) - 1.0)


# ----------------------------------------------------------------------------
# Kernel 1/3: two-stage CRN (stage1 non-gated, stage2 gated), all scales and
# all sampled subsets of both stages computed in a single kernel invocation.
#
#   objs_ref : (O1*N, D) f32   stacked objects (object-major rows)
#   cond*_ref: (N, D)    f32   conditioning features for each stage
#   sel*_ref : (n_sc, S*N, O*N) f32  subset-mean selection matrices (1/k folded)
#   red*_ref : (n_sc, N, S*N)   f32  subset-sum/normalization matrices (1/count)
#   wy*/wc*  : (n_sc, D, Dout) bf16  fused Linear split into g-part / cond-part
#                                    (gated stage: Dout = 2D = [fusion | gate])
#   b*_ref   : (n_sc, 1, Dout) f32
#   out_ref  : (n_sc2, N, D)   f32
# ----------------------------------------------------------------------------
def two_stage_crn_kernel(objs_ref, cond1_ref, cond2_ref,
                         sel1_ref, red1_ref, wy1_ref, wc1_ref, b1_ref,
                         sel2_ref, red2_ref, wy2_ref, wc2_ref, b2_ref,
                         out_ref):
    d = objs_ref.shape[-1]

    def crn_stage(objs, cond_ref, sel_ref, red_ref, wy_ref, wc_ref, b_ref, gated):
        n_sc = sel_ref.shape[0]
        n_rows = red_ref.shape[1]
        s_max = sel_ref.shape[1] // n_rows
        cond_bf = cond_ref[...].astype(jnp.bfloat16)                 # (N, D)
        monos = []
        for i in range(n_sc):                                        # static, tiny
            # subset means for all sampled subsets at once (mean folded into sel)
            g = jnp.dot(sel_ref[i], objs,
                        preferred_element_type=jnp.float32)          # (S*N, D)
            cond_term = (jnp.dot(cond_bf, wc_ref[i],
                                 preferred_element_type=jnp.float32)
                         + b_ref[i])                                 # (N, Dout)
            if s_max > 1:
                cond_term = jnp.concatenate([cond_term] * s_max, axis=0)
            y = (jnp.dot(g.astype(jnp.bfloat16), wy_ref[i],
                         preferred_element_type=jnp.float32)
                 + cond_term)                                        # (S*N, Dout)
            if gated:
                h = _elu(y[:, :d]) * jax.nn.sigmoid(y[:, d:])        # (S*N, D)
            else:
                h = _elu(y)
            # subset-sum / count (padded subsets are zero-weighted in red)
            monos.append(jnp.dot(red_ref[i], h,
                                 preferred_element_type=jnp.float32))  # (N, D)
        return monos

    stage1 = crn_stage(objs_ref[...], cond1_ref, sel1_ref, red1_ref,
                       wy1_ref, wc1_ref, b1_ref, gated=False)
    objs2 = stage1[0] if len(stage1) == 1 else jnp.concatenate(stage1, axis=0)
    stage2 = crn_stage(objs2, cond2_ref, sel2_ref, red2_ref,
                       wy2_ref, wc2_ref, b2_ref, gated=True)
    for i in range(len(stage2)):
        out_ref[i, :, :] = stage2[i]


def two_stage_crn(objs, cond1, cond2, sel1, red1, w1, sel2, red2, w2):
    wy1, wc1, b1 = w1
    wy2, wc2, b2 = w2
    n_sc2 = wy2.shape[0]
    n_rows = red2.shape[1]
    d = objs.shape[-1]
    return pl.pallas_call(
        two_stage_crn_kernel,
        out_shape=jax.ShapeDtypeStruct((n_sc2, n_rows, d), jnp.float32),
        in_specs=[_VMEM_SPEC] * 13,
        out_specs=_VMEM_SPEC,
    )(objs, cond1, cond2, sel1, red1, wy1, wc1, b1, sel2, red2, wy2, wc2, b2)


# ----------------------------------------------------------------------------
# Kernel 2/3: both LSTM encoders (last hidden state) + their projections,
# fused into a single kernel. PyTorch gate order: i, f, g, o.
# ----------------------------------------------------------------------------
def dual_lstm_proj_kernel(xm_ref, xh_ref,
                          wih_m_ref, whh_m_ref, bm_ref,
                          wih_h_ref, whh_h_ref, bh_ref,
                          wpm_ref, bpm_ref, wph_ref, bph_ref,
                          om_ref, oh_ref):
    def run(x_ref, wih_ref, whh_ref, b_ref, wp_ref, bp_ref, out_ref):
        t_len = x_ref.shape[1]
        hid = whh_ref.shape[0]
        h = None
        c = None
        for t in range(t_len):                                   # static, unrolled
            xt = x_ref[:, t, :].astype(jnp.bfloat16)
            gates = (jnp.dot(xt, wih_ref[...],
                             preferred_element_type=jnp.float32) + b_ref[...])
            if h is not None:                                    # skip h@Whh at t=0
                gates = gates + jnp.dot(h.astype(jnp.bfloat16), whh_ref[...],
                                        preferred_element_type=jnp.float32)
            i_g = jax.nn.sigmoid(gates[:, 0:hid])
            f_g = jax.nn.sigmoid(gates[:, hid:2 * hid])
            g_g = jnp.tanh(gates[:, 2 * hid:3 * hid])
            o_g = jax.nn.sigmoid(gates[:, 3 * hid:4 * hid])
            c = i_g * g_g if c is None else f_g * c + i_g * g_g
            h = o_g * jnp.tanh(c)
        # fused projection epilogue
        out_ref[...] = (jnp.dot(h.astype(jnp.bfloat16), wp_ref[...],
                                preferred_element_type=jnp.float32) + bp_ref[...])

    run(xm_ref, wih_m_ref, whh_m_ref, bm_ref, wpm_ref, bpm_ref, om_ref)
    run(xh_ref, wih_h_ref, whh_h_ref, bh_ref, wph_ref, bph_ref, oh_ref)


def dual_lstm_proj(xm, xh, lstm_m, lstm_h, proj_m, proj_h):
    bsz = xm.shape[0]
    hid = lstm_m[1].shape[0]
    return pl.pallas_call(
        dual_lstm_proj_kernel,
        out_shape=(jax.ShapeDtypeStruct((bsz, hid), jnp.float32),
                   jax.ShapeDtypeStruct((bsz, hid), jnp.float32)),
        in_specs=[_VMEM_SPEC] * 12,
        out_specs=(_VMEM_SPEC, _VMEM_SPEC),
    )(xm, xh, *lstm_m, *lstm_h, *proj_m, *proj_h)


# ----------------------------------------------------------------------------
# Host-side CRN "plan": relation enumeration + subset subsampling, encoded as
# selection (mean, 1/k) and reduction (sum/count, padding mask) matrices.
# Sampling is per independent group (per clip at the clip level), matching the
# per-clip np.random.choice draws of the original module.
# ----------------------------------------------------------------------------
def build_crn_plan(num_objects, max_subset_size, spl_resolution,
                   num_groups, group_size, rng):
    n = num_objects
    scales = list(range(n, 1, -1))
    relations_scales = [list(itertools.combinations(range(n), s)) for s in scales]
    subsample_scales = [min(spl_resolution, len(r)) for r in relations_scales]
    start_scale = 1 if (len(scales) > 1 and max_subset_size == n) else 0
    used = list(range(start_scale, min(len(scales), max_subset_size)))
    s_max = max(subsample_scales[i] for i in used)
    n_rows = num_groups * group_size

    sel = np.zeros((len(used), s_max * n_rows, n * n_rows), np.float32)
    red = np.zeros((len(used), n_rows, s_max * n_rows), np.float32)
    for li, sid in enumerate(used):
        k = scales[sid]
        rels = relations_scales[sid]
        count = subsample_scales[sid]
        for grp in range(num_groups):
            idx_sample = rng.choice(len(rels), count, replace=False)
            for s, ridx in enumerate(idx_sample):
                for o in rels[ridx]:
                    for r in range(group_size):
                        row = grp * group_size + r
                        sel[li, s * n_rows + row, o * n_rows + row] = 1.0 / k
        for s in range(count):
            for row in range(n_rows):
                red[li, row, s * n_rows + row] = 1.0 / count
    return used, jnp.asarray(sel), jnp.asarray(red)


def stack_crn_weights(layers, gate_layers, used):
    # Linear(2D -> D): cat(g, cond) @ W^T == g @ W^T[:D] + cond @ W^T[D:]
    # Gated: concat fusion/gate weights along the output dim (one 2D-wide matmul).
    if gate_layers is None:
        wy = jnp.stack([layers[i][0] for i in used])
        wc = jnp.stack([layers[i][1] for i in used])
        b = jnp.stack([layers[i][2] for i in used])
    else:
        wy = jnp.stack([jnp.concatenate([layers[i][0], gate_layers[i][0]], axis=1)
                        for i in used])
        wc = jnp.stack([jnp.concatenate([layers[i][1], gate_layers[i][1]], axis=1)
                        for i in used])
        b = jnp.stack([jnp.concatenate([layers[i][2], gate_layers[i][2]], axis=1)
                       for i in used])
    return wy.astype(jnp.bfloat16), wc.astype(jnp.bfloat16), b


# ----------------------------------------------------------------------------
# Relation_Extraction_Module forward
# ----------------------------------------------------------------------------
def relation_extraction_forward(params, appearance, motion, hand,
                                spl_resolution, module_dim, sample_seed=0):
    rng = np.random.default_rng(sample_seed)
    bsz, num_clips, num_frames, dim = appearance.shape

    # ---- clip level: all clips batched into the row dimension --------------
    n_rows1 = num_clips * bsz
    # object j (frame j) rows: clip-major, batch-minor
    objs1 = jnp.transpose(appearance, (2, 1, 0, 3)).reshape(num_frames * n_rows1, dim)
    cond_m1 = jnp.transpose(motion, (1, 0, 2)).reshape(n_rows1, dim)
    cond_h1 = jnp.transpose(hand, (1, 0, 2)).reshape(n_rows1, dim)

    used_m, sel_m, red_m = build_crn_plan(num_frames, num_frames, spl_resolution,
                                          num_groups=num_clips, group_size=bsz, rng=rng)
    used_h, sel_h, red_h = build_crn_plan(len(used_m), num_frames - 2, spl_resolution,
                                          num_groups=num_clips, group_size=bsz, rng=rng)
    w_m = stack_crn_weights(params['clip_motion'][0], None, used_m)
    w_h = stack_crn_weights(params['clip_hand'][0], params['clip_hand'][1], used_h)

    clip_out = two_stage_crn(objs1, cond_m1, cond_h1,
                             sel_m, red_m, w_m, sel_h, red_h, w_h)   # (T2, C*B, D)
    t2 = clip_out.shape[0]

    # ---- video level: LSTM encoders + projections (one fused kernel) -------
    vl_motion, vl_hand = dual_lstm_proj(motion, hand,
                                        params['lstm_motion'], params['lstm_hand'],
                                        params['motion_proj'], params['hand_proj'])

    n_rows2 = bsz * t2
    # per-clip object rows: (b, t) flattened batch-major
    vid_objs = jnp.transpose(clip_out.reshape(t2, num_clips, bsz, dim),
                             (1, 2, 0, 3)).reshape(num_clips * n_rows2, dim)
    cond_m2 = jnp.repeat(vl_motion, t2, axis=0)                      # (B*T2, D)
    cond_h2 = jnp.repeat(vl_hand, t2, axis=0)

    used_vm, sel_vm, red_vm = build_crn_plan(num_clips, num_clips, spl_resolution,
                                             num_groups=1, group_size=n_rows2, rng=rng)
    used_vh, sel_vh, red_vh = build_crn_plan(len(used_vm), num_clips - 2, spl_resolution,
                                             num_groups=1, group_size=n_rows2, rng=rng)
    w_vm = stack_crn_weights(params['video_motion'][0], None, used_vm)
    w_vh = stack_crn_weights(params['video_hand'][0], params['video_hand'][1], used_vh)

    vid_out = two_stage_crn(vid_objs, cond_m2, cond_h2,
                            sel_vm, red_vm, w_vm, sel_vh, red_vh, w_vh)  # (R, B*T2, D)
    n_rel = vid_out.shape[0]
    out = jnp.transpose(vid_out.reshape(n_rel, bsz, t2, dim), (1, 0, 2, 3))
    return out.reshape(bsz, n_rel * t2, dim)


# ----------------------------------------------------------------------------
# Deterministic parameter initialization (PyTorch-style uniform fan-in bounds)
# ----------------------------------------------------------------------------
def _uniform(key, shape, bound):
    return jax.random.uniform(key, shape, jnp.float32, -bound, bound)


def init_crn_linear(key, module_dim):
    k1, k2 = jax.random.split(key)
    bound = 1.0 / np.sqrt(2 * module_dim)
    wt = _uniform(k1, (2 * module_dim, module_dim), bound)    # transposed (in, out)
    b = _uniform(k2, (1, module_dim), bound)
    # split so that cat(g, cond) @ W^T == g @ wt[:D] + cond @ wt[D:]
    return wt[:module_dim], wt[module_dim:], b


def init_crn(key, module_dim, num_objects, gating):
    n_layers = max(num_objects - 1, 0)
    keys = jax.random.split(key, max(2 * n_layers, 1))
    layers = [init_crn_linear(keys[i], module_dim) for i in range(n_layers)]
    gates = ([init_crn_linear(keys[n_layers + i], module_dim)
              for i in range(n_layers)] if gating else None)
    return layers, gates


def init_linear(key, in_dim, out_dim):
    k1, k2 = jax.random.split(key)
    bound = 1.0 / np.sqrt(in_dim)
    w = _uniform(k1, (in_dim, out_dim), bound)
    b = _uniform(k2, (1, out_dim), bound)
    return w.astype(jnp.bfloat16), b


def init_lstm(key, in_dim, hidden):
    k1, k2, k3, k4 = jax.random.split(key, 4)
    bound = 1.0 / np.sqrt(hidden)
    w_ih_t = _uniform(k1, (in_dim, 4 * hidden), bound)
    w_hh_t = _uniform(k2, (hidden, 4 * hidden), bound)
    b = _uniform(k3, (1, 4 * hidden), bound) + _uniform(k4, (1, 4 * hidden), bound)
    return w_ih_t.astype(jnp.bfloat16), w_hh_t.astype(jnp.bfloat16), b


# ----------------------------------------------------------------------------
# Main
# ----------------------------------------------------------------------------
if __name__ == "__main__":
    B = 2
    k_max_clip_level = 4      # num_clips
    k_max_frame_level = 6     # num_frames
    spl_resolution = 1
    vision_dim = module_dim = 128   # must match for CRN fusion dims (as in HCRN)

    key = jax.random.PRNGKey(0)
    keys = jax.random.split(key, 16)

    appearance = jax.random.normal(
        keys[0], (B, k_max_clip_level, k_max_frame_level, vision_dim), jnp.float32)
    motion = jax.random.normal(keys[1], (B, k_max_clip_level, vision_dim), jnp.float32)
    hand = jax.random.normal(keys[2], (B, k_max_clip_level, vision_dim), jnp.float32)

    params = {
        'clip_motion': init_crn(keys[3], module_dim, k_max_frame_level, gating=False),
        'clip_hand':   init_crn(keys[4], module_dim, k_max_frame_level - 2, gating=True),
        'video_motion': init_crn(keys[5], module_dim, k_max_clip_level, gating=False),
        'video_hand':  init_crn(keys[6], module_dim, k_max_clip_level - 2, gating=True),
        'lstm_motion': init_lstm(keys[7], vision_dim, module_dim),
        'lstm_hand':   init_lstm(keys[8], vision_dim, module_dim),
        'motion_proj': init_linear(keys[9], module_dim, module_dim),
        'hand_proj':   init_linear(keys[10], module_dim, module_dim),
    }

    out = relation_extraction_forward(params, appearance, motion, hand,
                                      spl_resolution, module_dim)
    out = jax.block_until_ready(out)
    assert out.ndim == 3 and out.shape[0] == B and out.shape[-1] == module_dim, out.shape
    assert bool(jnp.all(jnp.isfinite(out)))
    print("KERNEL_OK")
</pallas_src>

<mosaic_0001>
module attributes {stable_mosaic.version = 11 : i64} {
  func.func @two_stage_crn_kernel(%arg0: memref<48x128xf32, #tpu.memory_space<vmem>>, %arg1: memref<8x128xf32, #tpu.memory_space<vmem>>, %arg2: memref<8x128xf32, #tpu.memory_space<vmem>>, %arg3: memref<4x8x48xf32, #tpu.memory_space<vmem>>, %arg4: memref<4x8x8xf32, #tpu.memory_space<vmem>>, %arg5: memref<4x128x128xbf16, #tpu.memory_space<vmem>>, %arg6: memref<4x128x128xbf16, #tpu.memory_space<vmem>>, %arg7: memref<4x1x128xf32, #tpu.memory_space<vmem>>, %arg8: memref<2x8x32xf32, #tpu.memory_space<vmem>>, %arg9: memref<2x8x8xf32, #tpu.memory_space<vmem>>, %arg10: memref<2x128x256xbf16, #tpu.memory_space<vmem>>, %arg11: memref<2x128x256xbf16, #tpu.memory_space<vmem>>, %arg12: memref<2x1x256xf32, #tpu.memory_space<vmem>>, %arg13: memref<2x8x128xf32, #tpu.memory_space<vmem>>) attributes {dimension_semantics = [], scalar_prefetch = 0 : i64, scratch_operands = 0 : i64, tpu.core_type = #tpu.core_type<tc>} {
    %c0 = arith.constant 0 : index
    %c0_0 = arith.constant 0 : index
    %0 = vector.load %arg0[%c0, %c0_0] : memref<48x128xf32, #tpu.memory_space<vmem>>, vector<48x128xf32>
    %c0_1 = arith.constant 0 : index
    %c0_2 = arith.constant 0 : index
    %1 = vector.load %arg1[%c0_1, %c0_2] : memref<8x128xf32, #tpu.memory_space<vmem>>, vector<8x128xf32>
    %2 = arith.truncf %1 : vector<8x128xf32> to vector<8x128xbf16>
    %c0_3 = arith.constant 0 : index
    %c0_4 = arith.constant 0 : index
    %c0_5 = arith.constant 0 : index
    %3 = vector.load %arg3[%c0_3, %c0_4, %c0_5] : memref<4x8x48xf32, #tpu.memory_space<vmem>>, vector<1x8x48xf32>
    %4 = vector.shape_cast %3 : vector<1x8x48xf32> to vector<8x48xf32>
    %cst = arith.constant dense<0.000000e+00> : vector<8x128xf32>
    %5 = tpu.matmul %4, %0, %cst {dimension_numbers = #tpu.dot_dimension_numbers<[1], [0], [0], [1], [0, 0, 1, 1], [], []>} : vector<8x48xf32>, vector<48x128xf32>, vector<8x128xf32> -> vector<8x128xf32>
    %c0_6 = arith.constant 0 : index
    %c0_7 = arith.constant 0 : index
    %c0_8 = arith.constant 0 : index
    %6 = vector.load %arg6[%c0_6, %c0_7, %c0_8] : memref<4x128x128xbf16, #tpu.memory_space<vmem>>, vector<1x128x128xbf16>
    %7 = vector.shape_cast %6 : vector<1x128x128xbf16> to vector<128x128xbf16>
    %cst_9 = arith.constant dense<0.000000e+00> : vector<8x128xf32>
    %8 = tpu.matmul %2, %7, %cst_9 {dimension_numbers = #tpu.dot_dimension_numbers<[1], [0], [0], [1], [0, 0, 1, 1], [], []>} : vector<8x128xbf16>, vector<128x128xbf16>, vector<8x128xf32> -> vector<8x128xf32>
    %c0_10 = arith.constant 0 : index
    %c0_11 = arith.constant 0 : index
    %c0_12 = arith.constant 0 : index
    %9 = vector.load %arg7[%c0_10, %c0_11, %c0_12] : memref<4x1x128xf32, #tpu.memory_space<vmem>>, vector<1x1x128xf32>
    %10 = vector.shape_cast %9 : vector<1x1x128xf32> to vector<1x128xf32>
    %11 = vector.broadcast %10 : vector<1x128xf32> to vector<8x128xf32>
    %12 = arith.addf %8, %11 : vector<8x128xf32>
    %13 = arith.truncf %5 : vector<8x128xf32> to vector<8x128xbf16>
    %c0_13 = arith.constant 0 : index
    %c0_14 = arith.constant 0 : index
    %c0_15 = arith.constant 0 : index
    %14 = vector.load %arg5[%c0_13, %c0_14, %c0_15] : memref<4x128x128xbf16, #tpu.memory_space<vmem>>, vector<1x128x128xbf16>
    %15 = vector.shape_cast %14 : vector<1x128x128xbf16> to vector<128x128xbf16>
    %cst_16 = arith.constant dense<0.000000e+00> : vector<8x128xf32>
    %16 = tpu.matmul %13, %15, %cst_16 {dimension_numbers = #tpu.dot_dimension_numbers<[1], [0], [0], [1], [0, 0, 1, 1], [], []>} : vector<8x128xbf16>, vector<128x128xbf16>, vector<8x128xf32> -> vector<8x128xf32>
    %17 = arith.addf %16, %12 : vector<8x128xf32>
    %cst_17 = arith.constant 0.000000e+00 : f32
    %18 = vector.broadcast %cst_17 : f32 to vector<8x128xf32>
    %19 = arith.cmpf ogt, %17, %18 : vector<8x128xf32>
    %cst_18 = arith.constant 0.000000e+00 : f32
    %20 = vector.broadcast %cst_18 : f32 to vector<8x128xf32>
    %21 = arith.minimumf %17, %20 : vector<8x128xf32>
    %22 = math.exp %21 : vector<8x128xf32>
    %cst_19 = arith.constant 1.000000e+00 : f32
    %23 = vector.broadcast %cst_19 : f32 to vector<8x128xf32>
    %24 = arith.subf %22, %23 : vector<8x128xf32>
    %25 = arith.select %19, %17, %24 : vector<8x128xi1>, vector<8x128xf32>
    %c0_20 = arith.constant 0 : index
    %c0_21 = arith.constant 0 : index
    %c0_22 = arith.constant 0 : index
    %26 = vector.load %arg4[%c0_20, %c0_21, %c0_22] : memref<4x8x8xf32, #tpu.memory_space<vmem>>, vector<1x8x8xf32>
    %27 = vector.shape_cast %26 : vector<1x8x8xf32> to vector<8x8xf32>
    %cst_23 = arith.constant dense<0.000000e+00> : vector<8x128xf32>
    %28 = tpu.matmul %27, %25, %cst_23 {dimension_numbers = #tpu.dot_dimension_numbers<[1], [0], [0], [1], [0, 0, 1, 1], [], []>} : vector<8x8xf32>, vector<8x128xf32>, vector<8x128xf32> -> vector<8x128xf32>
    %c1 = arith.constant 1 : index
    %c0_24 = arith.constant 0 : index
    %c0_25 = arith.constant 0 : index
    %29 = vector.load %arg3[%c1, %c0_24, %c0_25] : memref<4x8x48xf32, #tpu.memory_space<vmem>>, vector<1x8x48xf32>
    %30 = vector.shape_cast %29 : vector<1x8x48xf32> to vector<8x48xf32>
    %cst_26 = arith.constant dense<0.000000e+00> : vector<8x128xf32>
    %31 = tpu.matmul %30, %0, %cst_26 {dimension_numbers = #tpu.dot_dimension_numbers<[1], [0], [0], [1], [0, 0, 1, 1], [], []>} : vector<8x48xf32>, vector<48x128xf32>, vector<8x128xf32> -> vector<8x128xf32>
    %c1_27 = arith.constant 1 : index
    %c0_28 = arith.constant 0 : index
    %c0_29 = arith.constant 0 : index
    %32 = vector.load %arg6[%c1_27, %c0_28, %c0_29] : memref<4x128x128xbf16, #tpu.memory_space<vmem>>, vector<1x128x128xbf16>
    %33 = vector.shape_cast %32 : vector<1x128x128xbf16> to vector<128x128xbf16>
    %cst_30 = arith.constant dense<0.000000e+00> : vector<8x128xf32>
    %34 = tpu.matmul %2, %33, %cst_30 {dimension_numbers = #tpu.dot_dimension_numbers<[1], [0], [0], [1], [0, 0, 1, 1], [], []>} : vector<8x128xbf16>, vector<128x128xbf16>, vector<8x128xf32> -> vector<8x128xf32>
    %c1_31 = arith.constant 1 : index
    %c0_32 = arith.constant 0 : index
    %c0_33 = arith.constant 0 : index
    %35 = vector.load %arg7[%c1_31, %c0_32, %c0_33] : memref<4x1x128xf32, #tpu.memory_space<vmem>>, vector<1x1x128xf32>
    %36 = vector.shape_cast %35 : vector<1x1x128xf32> to vector<1x128xf32>
    %37 = vector.broadcast %36 : vector<1x128xf32> to vector<8x128xf32>
    %38 = arith.addf %34, %37 : vector<8x128xf32>
    %39 = arith.truncf %31 : vector<8x128xf32> to vector<8x128xbf16>
    %c1_34 = arith.constant 1 : index
    %c0_35 = arith.constant 0 : index
    %c0_36 = arith.constant 0 : index
    %40 = vector.load %arg5[%c1_34, %c0_35, %c0_36] : memref<4x128x128xbf16, #tpu.memory_space<vmem>>, vector<1x128x128xbf16>
    %41 = vector.shape_cast %40 : vector<1x128x128xbf16> to vector<128x128xbf16>
    %cst_37 = arith.constant dense<0.000000e+00> : vector<8x128xf32>
    %42 = tpu.matmul %39, %41, %cst_37 {dimension_numbers = #tpu.dot_dimension_numbers<[1], [0], [0], [1], [0, 0, 1, 1], [], []>} : vector<8x128xbf16>, vector<128x128xbf16>, vector<8x128xf32> -> vector<8x128xf32>
    %43 = arith.addf %42, %38 : vector<8x128xf32>
    %cst_38 = arith.constant 0.000000e+00 : f32
    %44 = vector.broadcast %cst_38 : f32 to vector<8x128xf32>
    %45 = arith.cmpf ogt, %43, %44 : vector<8x128xf32>
    %cst_39 = arith.constant 0.000000e+00 : f32
    %46 = vector.broadcast %cst_39 : f32 to vector<8x128xf32>
    %47 = arith.minimumf %43, %46 : vector<8x128xf32>
    %48 = math.exp %47 : vector<8x128xf32>
    %cst_40 = arith.constant 1.000000e+00 : f32
    %49 = vector.broadcast %cst_40 : f32 to vector<8x128xf32>
    %50 = arith.subf %48, %49 : vector<8x128xf32>
    %51 = arith.select %45, %43, %50 : vector<8x128xi1>, vector<8x128xf32>
    %c1_41 = arith.constant 1 : index
    %c0_42 = arith.constant 0 : index
    %c0_43 = arith.constant 0 : index
    %52 = vector.load %arg4[%c1_41, %c0_42, %c0_43] : memref<4x8x8xf32, #tpu.memory_space<vmem>>, vector<1x8x8xf32>
    %53 = vector.shape_cast %52 : vector<1x8x8xf32> to vector<8x8xf32>
    %cst_44 = arith.constant dense<0.000000e+00> : vector<8x128xf32>
    %54 = tpu.matmul %53, %51, %cst_44 {dimension_numbers = #tpu.dot_dimension_numbers<[1], [0], [0], [1], [0, 0, 1, 1], [], []>} : vector<8x8xf32>, vector<8x128xf32>, vector<8x128xf32> -> vector<8x128xf32>
    %c2 = arith.constant 2 : index
    %c0_45 = arith.constant 0 : index
    %c0_46 = arith.constant 0 : index
    %55 = vector.load %arg3[%c2, %c0_45, %c0_46] : memref<4x8x48xf32, #tpu.memory_space<vmem>>, vector<1x8x48xf32>
    %56 = vector.shape_cast %55 : vector<1x8x48xf32> to vector<8x48xf32>
    %cst_47 = arith.constant dense<0.000000e+00> : vector<8x128xf32>
    %57 = tpu.matmul %56, %0, %cst_47 {dimension_numbers = #tpu.dot_dimension_numbers<[1], [0], [0], [1], [0, 0, 1, 1], [], []>} : vector<8x48xf32>, vector<48x128xf32>, vector<8x128xf32> -> vector<8x128xf32>
    %c2_48 = arith.constant 2 : index
    %c0_49 = arith.constant 0 : index
    %c0_50 = arith.constant 0 : index
    %58 = vector.load %arg6[%c2_48, %c0_49, %c0_50] : memref<4x128x128xbf16, #tpu.memory_space<vmem>>, vector<1x128x128xbf16>
    %59 = vector.shape_cast %58 : vector<1x128x128xbf16> to vector<128x128xbf16>
    %cst_51 = arith.constant dense<0.000000e+00> : vector<8x128xf32>
    %60 = tpu.matmul %2, %59, %cst_51 {dimension_numbers = #tpu.dot_dimension_numbers<[1], [0], [0], [1], [0, 0, 1, 1], [], []>} : vector<8x128xbf16>, vector<128x128xbf16>, vector<8x128xf32> -> vector<8x128xf32>
    %c2_52 = arith.constant 2 : index
    %c0_53 = arith.constant 0 : index
    %c0_54 = arith.constant 0 : index
    %61 = vector.load %arg7[%c2_52, %c0_53, %c0_54] : memref<4x1x128xf32, #tpu.memory_space<vmem>>, vector<1x1x128xf32>
    %62 = vector.shape_cast %61 : vector<1x1x128xf32> to vector<1x128xf32>
    %63 = vector.broadcast %62 : vector<1x128xf32> to vector<8x128xf32>
    %64 = arith.addf %60, %63 : vector<8x128xf32>
    %65 = arith.truncf %57 : vector<8x128xf32> to vector<8x128xbf16>
    %c2_55 = arith.constant 2 : index
    %c0_56 = arith.constant 0 : index
    %c0_57 = arith.constant 0 : index
    %66 = vector.load %arg5[%c2_55, %c0_56, %c0_57] : memref<4x128x128xbf16, #tpu.memory_space<vmem>>, vector<1x128x128xbf16>
    %67 = vector.shape_cast %66 : vector<1x128x128xbf16> to vector<128x128xbf16>
    %cst_58 = arith.constant dense<0.000000e+00> : vector<8x128xf32>
    %68 = tpu.matmul %65, %67, %cst_58 {dimension_numbers = #tpu.dot_dimension_numbers<[1], [0], [0], [1], [0, 0, 1, 1], [], []>} : vector<8x128xbf16>, vector<128x128xbf16>, vector<8x128xf32> -> vector<8x128xf32>
    %69 = arith.addf %68, %64 : vector<8x128xf32>
    %cst_59 = arith.constant 0.000000e+00 : f32
    %70 = vector.broadcast %cst_59 : f32 to vector<8x128xf32>
    %71 = arith.cmpf ogt, %69, %70 : vector<8x128xf32>
    %cst_60 = arith.constant 0.000000e+00 : f32
    %72 = vector.broadcast %cst_60 : f32 to vector<8x128xf32>
    %73 = arith.minimumf %69, %72 : vector<8x128xf32>
    %74 = math.exp %73 : vector<8x128xf32>
    %cst_61 = arith.constant 1.000000e+00 : f32
    %75 = vector.broadcast %cst_61 : f32 to vector<8x128xf32>
    %76 = arith.subf %74, %75 : vector<8x128xf32>
    %77 = arith.select %71, %69, %76 : vector<8x128xi1>, vector<8x128xf32>
    %c2_62 = arith.constant 2 : index
    %c0_63 = arith.constant 0 : index
    %c0_64 = arith.constant 0 : index
    %78 = vector.load %arg4[%c2_62, %c0_63, %c0_64] : memref<4x8x8xf32, #tpu.memory_space<vmem>>, vector<1x8x8xf32>
    %79 = vector.shape_cast %78 : vector<1x8x8xf32> to vector<8x8xf32>
    %cst_65 = arith.constant dense<0.000000e+00> : vector<8x128xf32>
    %80 = tpu.matmul %79, %77, %cst_65 {dimension_numbers = #tpu.dot_dimension_numbers<[1], [0], [0], [1], [0, 0, 1, 1], [], []>} : vector<8x8xf32>, vector<8x128xf32>, vector<8x128xf32> -> vector<8x128xf32>
    %c3 = arith.constant 3 : index
    %c0_66 = arith.constant 0 : index
    %c0_67 = arith.constant 0 : index
    %81 = vector.load %arg3[%c3, %c0_66, %c0_67] : memref<4x8x48xf32, #tpu.memory_space<vmem>>, vector<1x8x48xf32>
    %82 = vector.shape_cast %81 : vector<1x8x48xf32> to vector<8x48xf32>
    %cst_68 = arith.constant dense<0.000000e+00> : vector<8x128xf32>
    %83 = tpu.matmul %82, %0, %cst_68 {dimension_numbers = #tpu.dot_dimension_numbers<[1], [0], [0], [1], [0, 0, 1, 1], [], []>} : vector<8x48xf32>, vector<48x128xf32>, vector<8x128xf32> -> vector<8x128xf32>
    %c3_69 = arith.constant 3 : index
    %c0_70 = arith.constant 0 : index
    %c0_71 = arith.constant 0 : index
    %84 = vector.load %arg6[%c3_69, %c0_70, %c0_71] : memref<4x128x128xbf16, #tpu.memory_space<vmem>>, vector<1x128x128xbf16>
    %85 = vector.shape_cast %84 : vector<1x128x128xbf16> to vector<128x128xbf16>
    %cst_72 = arith.constant dense<0.000000e+00> : vector<8x128xf32>
    %86 = tpu.matmul %2, %85, %cst_72 {dimension_numbers = #tpu.dot_dimension_numbers<[1], [0], [0], [1], [0, 0, 1, 1], [], []>} : vector<8x128xbf16>, vector<128x128xbf16>, vector<8x128xf32> -> vector<8x128xf32>
    %c3_73 = arith.constant 3 : index
    %c0_74 = arith.constant 0 : index
    %c0_75 = arith.constant 0 : index
    %87 = vector.load %arg7[%c3_73, %c0_74, %c0_75] : memref<4x1x128xf32, #tpu.memory_space<vmem>>, vector<1x1x128xf32>
    %88 = vector.shape_cast %87 : vector<1x1x128xf32> to vector<1x128xf32>
    %89 = vector.broadcast %88 : vector<1x128xf32> to vector<8x128xf32>
    %90 = arith.addf %86, %89 : vector<8x128xf32>
    %91 = arith.truncf %83 : vector<8x128xf32> to vector<8x128xbf16>
    %c3_76 = arith.constant 3 : index
    %c0_77 = arith.constant 0 : index
    %c0_78 = arith.constant 0 : index
    %92 = vector.load %arg5[%c3_76, %c0_77, %c0_78] : memref<4x128x128xbf16, #tpu.memory_space<vmem>>, vector<1x128x128xbf16>
    %93 = vector.shape_cast %92 : vector<1x128x128xbf16> to vector<128x128xbf16>
    %cst_79 = arith.constant dense<0.000000e+00> : vector<8x128xf32>
    %94 = tpu.matmul %91, %93, %cst_79 {dimension_numbers = #tpu.dot_dimension_numbers<[1], [0], [0], [1], [0, 0, 1, 1], [], []>} : vector<8x128xbf16>, vector<128x128xbf16>, vector<8x128xf32> -> vector<8x128xf32>
    %95 = arith.addf %94, %90 : vector<8x128xf32>
    %cst_80 = arith.constant 0.000000e+00 : f32
    %96 = vector.broadcast %cst_80 : f32 to vector<8x128xf32>
    %97 = arith.cmpf ogt, %95, %96 : vector<8x128xf32>
    %cst_81 = arith.constant 0.000000e+00 : f32
    %98 = vector.broadcast %cst_81 : f32 to vector<8x128xf32>
    %99 = arith.minimumf %95, %98 : vector<8x128xf32>
    %100 = math.exp %99 : vector<8x128xf32>
    %cst_82 = arith.constant 1.000000e+00 : f32
    %101 = vector.broadcast %cst_82 : f32 to vector<8x128xf32>
    %102 = arith.subf %100, %101 : vector<8x128xf32>
    %103 = arith.select %97, %95, %102 : vector<8x128xi1>, vector<8x128xf32>
    %c3_83 = arith.constant 3 : index
    %c0_84 = arith.constant 0 : index
    %c0_85 = arith.constant 0 : index
    %104 = vector.load %arg4[%c3_83, %c0_84, %c0_85] : memref<4x8x8xf32, #tpu.memory_space<vmem>>, vector<1x8x8xf32>
    %105 = vector.shape_cast %104 : vector<1x8x8xf32> to vector<8x8xf32>
    %cst_86 = arith.constant dense<0.000000e+00> : vector<8x128xf32>
    %106 = tpu.matmul %105, %103, %cst_86 {dimension_numbers = #tpu.dot_dimension_numbers<[1], [0], [0], [1], [0, 0, 1, 1], [], []>} : vector<8x8xf32>, vector<8x128xf32>, vector<8x128xf32> -> vector<8x128xf32>
    %107 = tpu.concatenate %28, %54, %80, %106 in 0 : vector<8x128xf32>, vector<8x128xf32>, vector<8x128xf32>, vector<8x128xf32> -> vector<32x128xf32>
    %c0_87 = arith.constant 0 : index
    %c0_88 = arith.constant 0 : index
    %108 = vector.load %arg2[%c0_87, %c0_88] : memref<8x128xf32, #tpu.memory_space<vmem>>, vector<8x128xf32>
    %109 = arith.truncf %108 : vector<8x128xf32> to vector<8x128xbf16>
    %c0_89 = arith.constant 0 : index
    %c0_90 = arith.constant 0 : index
    %c0_91 = arith.constant 0 : index
    %110 = vector.load %arg8[%c0_89, %c0_90, %c0_91] : memref<2x8x32xf32, #tpu.memory_space<vmem>>, vector<1x8x32xf32>
    %111 = vector.shape_cast %110 : vector<1x8x32xf32> to vector<8x32xf32>
    %cst_92 = arith.constant dense<0.000000e+00> : vector<8x128xf32>
    %112 = tpu.matmul %111, %107, %cst_92 {dimension_numbers = #tpu.dot_dimension_numbers<[1], [0], [0], [1], [0, 0, 1, 1], [], []>} : vector<8x32xf32>, vector<32x128xf32>, vector<8x128xf32> -> vector<8x128xf32>
    %c0_93 = arith.constant 0 : index
    %c0_94 = arith.constant 0 : index
    %c0_95 = arith.constant 0 : index
    %113 = vector.load %arg11[%c0_93, %c0_94, %c0_95] : memref<2x128x256xbf16, #tpu.memory_space<vmem>>, vector<1x128x256xbf16>
    %114 = vector.shape_cast %113 : vector<1x128x256xbf16> to vector<128x256xbf16>
    %cst_96 = arith.constant dense<0.000000e+00> : vector<8x256xf32>
    %115 = tpu.matmul %109, %114, %cst_96 {dimension_numbers = #tpu.dot_dimension_numbers<[1], [0], [0], [1], [0, 0, 1, 1], [], []>} : vector<8x128xbf16>, vector<128x256xbf16>, vector<8x256xf32> -> vector<8x256xf32>
    %c0_97 = arith.constant 0 : index
    %c0_98 = arith.constant 0 : index
    %c0_99 = arith.constant 0 : index
    %116 = vector.load %arg12[%c0_97, %c0_98, %c0_99] : memref<2x1x256xf32, #tpu.memory_space<vmem>>, vector<1x1x256xf32>
    %117 = vector.shape_cast %116 : vector<1x1x256xf32> to vector<1x256xf32>
    %118 = vector.broadcast %117 : vector<1x256xf32> to vector<8x256xf32>
    %119 = arith.addf %115, %118 : vector<8x256xf32>
    %120 = arith.truncf %112 : vector<8x128xf32> to vector<8x128xbf16>
    %c0_100 = arith.constant 0 : index
    %c0_101 = arith.constant 0 : index
    %c0_102 = arith.constant 0 : index
    %121 = vector.load %arg10[%c0_100, %c0_101, %c0_102] : memref<2x128x256xbf16, #tpu.memory_space<vmem>>, vector<1x128x256xbf16>
    %122 = vector.shape_cast %121 : vector<1x128x256xbf16> to vector<128x256xbf16>
    %cst_103 = arith.constant dense<0.000000e+00> : vector<8x256xf32>
    %123 = tpu.matmul %120, %122, %cst_103 {dimension_numbers = #tpu.dot_dimension_numbers<[1], [0], [0], [1], [0, 0, 1, 1], [], []>} : vector<8x128xbf16>, vector<128x256xbf16>, vector<8x256xf32> -> vector<8x256xf32>
    %124 = arith.addf %123, %119 : vector<8x256xf32>
    %125 = vector.extract_strided_slice %124 {offsets = [0, 0], sizes = [8, 128], strides = [1, 1]} : vector<8x256xf32> to vector<8x128xf32>
    %cst_104 = arith.constant 0.000000e+00 : f32
    %126 = vector.broadcast %cst_104 : f32 to vector<8x128xf32>
    %127 = arith.cmpf ogt, %125, %126 : vector<8x128xf32>
    %cst_105 = arith.constant 0.000000e+00 : f32
    %128 = vector.broadcast %cst_105 : f32 to vector<8x128xf32>
    %129 = arith.minimumf %125, %128 : vector<8x128xf32>
    %130 = math.exp %129 : vector<8x128xf32>
    %cst_106 = arith.constant 1.000000e+00 : f32
    %131 = vector.broadcast %cst_106 : f32 to vector<8x128xf32>
    %132 = arith.subf %130, %131 : vector<8x128xf32>
    %133 = arith.select %127, %125, %132 : vector<8x128xi1>, vector<8x128xf32>
    %134 = vector.extract_strided_slice %124 {offsets = [0, 128], sizes = [8, 128], strides = [1, 1]} : vector<8x256xf32> to vector<8x128xf32>
    %135 = arith.negf %134 : vector<8x128xf32>
    %136 = math.exp %135 : vector<8x128xf32>
    %cst_107 = arith.constant 1.000000e+00 : f32
    %137 = vector.broadcast %cst_107 : f32 to vector<8x128xf32>
    %138 = arith.addf %137, %136 : vector<8x128xf32>
    %139 = arith.divf %137, %138 : vector<8x128xf32>
    %140 = arith.mulf %133, %139 : vector<8x128xf32>
    %c0_108 = arith.constant 0 : index
    %c0_109 = arith.constant 0 : index
    %c0_110 = arith.constant 0 : index
    %141 = vector.load %arg9[%c0_108, %c0_109, %c0_110] : memref<2x8x8xf32, #tpu.memory_space<vmem>>, vector<1x8x8xf32>
    %142 = vector.shape_cast %141 : vector<1x8x8xf32> to vector<8x8xf32>
    %cst_111 = arith.constant dense<0.000000e+00> : vector<8x128xf32>
    %143 = tpu.matmul %142, %140, %cst_111 {dimension_numbers = #tpu.dot_dimension_numbers<[1], [0], [0], [1], [0, 0, 1, 1], [], []>} : vector<8x8xf32>, vector<8x128xf32>, vector<8x128xf32> -> vector<8x128xf32>
    %c1_112 = arith.constant 1 : index
    %c0_113 = arith.constant 0 : index
    %c0_114 = arith.constant 0 : index
    %144 = vector.load %arg8[%c1_112, %c0_113, %c0_114] : memref<2x8x32xf32, #tpu.memory_space<vmem>>, vector<1x8x32xf32>
    %145 = vector.shape_cast %144 : vector<1x8x32xf32> to vector<8x32xf32>
    %cst_115 = arith.constant dense<0.000000e+00> : vector<8x128xf32>
    %146 = tpu.matmul %145, %107, %cst_115 {dimension_numbers = #tpu.dot_dimension_numbers<[1], [0], [0], [1], [0, 0, 1, 1], [], []>} : vector<8x32xf32>, vector<32x128xf32>, vector<8x128xf32> -> vector<8x128xf32>
    %c1_116 = arith.constant 1 : index
    %c0_117 = arith.constant 0 : index
    %c0_118 = arith.constant 0 : index
    %147 = vector.load %arg11[%c1_116, %c0_117, %c0_118] : memref<2x128x256xbf16, #tpu.memory_space<vmem>>, vector<1x128x256xbf16>
    %148 = vector.shape_cast %147 : vector<1x128x256xbf16> to vector<128x256xbf16>
    %cst_119 = arith.constant dense<0.000000e+00> : vector<8x256xf32>
    %149 = tpu.matmul %109, %148, %cst_119 {dimension_numbers = #tpu.dot_dimension_numbers<[1], [0], [0], [1], [0, 0, 1, 1], [], []>} : vector<8x128xbf16>, vector<128x256xbf16>, vector<8x256xf32> -> vector<8x256xf32>
    %c1_120 = arith.constant 1 : index
    %c0_121 = arith.constant 0 : index
    %c0_122 = arith.constant 0 : index
    %150 = vector.load %arg12[%c1_120, %c0_121, %c0_122] : memref<2x1x256xf32, #tpu.memory_space<vmem>>, vector<1x1x256xf32>
    %151 = vector.shape_cast %150 : vector<1x1x256xf32> to vector<1x256xf32>
    %152 = vector.broadcast %151 : vector<1x256xf32> to vector<8x256xf32>
    %153 = arith.addf %149, %152 : vector<8x256xf32>
    %154 = arith.truncf %146 : vector<8x128xf32> to vector<8x128xbf16>
    %c1_123 = arith.constant 1 : index
    %c0_124 = arith.constant 0 : index
    %c0_125 = arith.constant 0 : index
    %155 = vector.load %arg10[%c1_123, %c0_124, %c0_125] : memref<2x128x256xbf16, #tpu.memory_space<vmem>>, vector<1x128x256xbf16>
    %156 = vector.shape_cast %155 : vector<1x128x256xbf16> to vector<128x256xbf16>
    %cst_126 = arith.constant dense<0.000000e+00> : vector<8x256xf32>
    %157 = tpu.matmul %154, %156, %cst_126 {dimension_numbers = #tpu.dot_dimension_numbers<[1], [0], [0], [1], [0, 0, 1, 1], [], []>} : vector<8x128xbf16>, vector<128x256xbf16>, vector<8x256xf32> -> vector<8x256xf32>
    %158 = arith.addf %157, %153 : vector<8x256xf32>
    %159 = vector.extract_strided_slice %158 {offsets = [0, 0], sizes = [8, 128], strides = [1, 1]} : vector<8x256xf32> to vector<8x128xf32>
    %cst_127 = arith.constant 0.000000e+00 : f32
    %160 = vector.broadcast %cst_127 : f32 to vector<8x128xf32>
    %161 = arith.cmpf ogt, %159, %160 : vector<8x128xf32>
    %cst_128 = arith.constant 0.000000e+00 : f32
    %162 = vector.broadcast %cst_128 : f32 to vector<8x128xf32>
    %163 = arith.minimumf %159, %162 : vector<8x128xf32>
    %164 = math.exp %163 : vector<8x128xf32>
    %cst_129 = arith.constant 1.000000e+00 : f32
    %165 = vector.broadcast %cst_129 : f32 to vector<8x128xf32>
    %166 = arith.subf %164, %165 : vector<8x128xf32>
    %167 = arith.select %161, %159, %166 : vector<8x128xi1>, vector<8x128xf32>
    %168 = vector.extract_strided_slice %158 {offsets = [0, 128], sizes = [8, 128], strides = [1, 1]} : vector<8x256xf32> to vector<8x128xf32>
    %169 = arith.negf %168 : vector<8x128xf32>
    %170 = math.exp %169 : vector<8x128xf32>
    %cst_130 = arith.constant 1.000000e+00 : f32
    %171 = vector.broadcast %cst_130 : f32 to vector<8x128xf32>
    %172 = arith.addf %171, %170 : vector<8x128xf32>
    %173 = arith.divf %171, %172 : vector<8x128xf32>
    %174 = arith.mulf %167, %173 : vector<8x128xf32>
    %c1_131 = arith.constant 1 : index
    %c0_132 = arith.constant 0 : index
    %c0_133 = arith.constant 0 : index
    %175 = vector.load %arg9[%c1_131, %c0_132, %c0_133] : memref<2x8x8xf32, #tpu.memory_space<vmem>>, vector<1x8x8xf32>
    %176 = vector.shape_cast %175 : vector<1x8x8xf32> to vector<8x8xf32>
    %cst_134 = arith.constant dense<0.000000e+00> : vector<8x128xf32>
    %177 = tpu.matmul %176, %174, %cst_134 {dimension_numbers = #tpu.dot_dimension_numbers<[1], [0], [0], [1], [0, 0, 1, 1], [], []>} : vector<8x8xf32>, vector<8x128xf32>, vector<8x128xf32> -> vector<8x128xf32>
    %c0_135 = arith.constant 0 : index
    %c0_136 = arith.constant 0 : index
    %c0_137 = arith.constant 0 : index
    %178 = vector.load %arg13[%c0_135, %c0_136, %c0_137] : memref<2x8x128xf32, #tpu.memory_space<vmem>>, vector<1x8x128xf32>
    %179 = vector.shape_cast %178 : vector<1x8x128xf32> to vector<8x128xf32>
    %180 = vector.shape_cast %143 : vector<8x128xf32> to vector<1x8x128xf32>
    tpu.vector_store %arg13[%c0_135, %c0_136, %c0_137], %180 {strides = array<i32>} : memref<2x8x128xf32, #tpu.memory_space<vmem>>, vector<1x8x128xf32>,
    %c1_138 = arith.constant 1 : index
    %c0_139 = arith.constant 0 : index
    %c0_140 = arith.constant 0 : index
    %181 = vector.load %arg13[%c1_138, %c0_139, %c0_140] : memref<2x8x128xf32, #tpu.memory_space<vmem>>, vector<1x8x128xf32>
    %182 = vector.shape_cast %181 : vector<1x8x128xf32> to vector<8x128xf32>
    %183 = vector.shape_cast %177 : vector<8x128xf32> to vector<1x8x128xf32>
    tpu.vector_store %arg13[%c1_138, %c0_139, %c0_140], %183 {strides = array<i32>} : memref<2x8x128xf32, #tpu.memory_space<vmem>>, vector<1x8x128xf32>,
    return
  }
}

</mosaic_0001>

<llo_original>
// kernel: tpu_custom_call.1
$region0: #{tpu_custom_call.1}
  #allocation0 [shape = 'u32[]', space=smem, size = 0x4, offset = 0x4, fixed_abs, tag = 'smem constant byte address 0x4 - core index']
  #allocation1 [shape = 'u32[144,128]{1,0:T(1,128)}', space=vmem, size = 0x12000, scoped, tag = 'internal scratch']
  %s0 = inlined_call_operand.hbm [shape: f32[48,128], index: 0, kind: input, shape index: {}]
  %s1 = inlined_call_operand.hbm [shape: f32[8,128], index: 1, kind: input, shape index: {}]
  %s2 = inlined_call_operand.hbm [shape: f32[8,128], index: 2, kind: input, shape index: {}]
  %s3 = inlined_call_operand.hbm [shape: f32[4,8,48], index: 3, kind: input, shape index: {}]
  %s4 = inlined_call_operand.hbm [shape: f32[4,8,8], index: 4, kind: input, shape index: {}]
  %s5 = inlined_call_operand.hbm [shape: bf16[4,128,128], index: 5, kind: input, shape index: {}]
  %s6 = inlined_call_operand.hbm [shape: bf16[4,128,128], index: 6, kind: input, shape index: {}]
  %s7 = inlined_call_operand.hbm [shape: f32[4,1,128], index: 7, kind: input, shape index: {}]
  %s8 = inlined_call_operand.vmem [shape: f32[2,8,32], index: 8, kind: input, shape index: {}]
  %s9 = inlined_call_operand.vmem [shape: f32[2,8,8], index: 9, kind: input, shape index: {}]
  %s10 = inlined_call_operand.hbm [shape: bf16[2,128,256], index: 10, kind: input, shape index: {}]
  %s11 = inlined_call_operand.hbm [shape: bf16[2,128,256], index: 11, kind: input, shape index: {}]
  %s12 = inlined_call_operand.vmem [shape: f32[2,1,256], index: 12, kind: input, shape index: {}]
  %s13 = inlined_call_operand.hbm [shape: f32[2,8,128], index: 13, kind: output, shape index: {}]
  %s14 = sld [smem:[#allocation0]]
  $region102: #{tpu_custom_call.1} parent=0
    _
  %s16 = ssub.s32 1, %s14
  %s17 = scalar_select 0, %s16, %s14
  $region1: #{tpu_custom_call.1} parent=0
    #allocation2 [shape = 'u8[24576]{0}', space=vmem, size = 0x6000, scoped, tag = 'input window, operand 0, single buffered']
    #allocation3 [shape = 's32[1]{0}', space=sflag, size = 0x4, scoped, tag = 'scoped memory for tpu_custom_call.1']
    #allocation4 [shape = 's32[1]{0}', space=sflag, size = 0x4, scoped, tag = 'scoped memory for tpu_custom_call.1']
    #allocation5 [shape = 'u8[4096]{0}', space=vmem, size = 0x1000, scoped, tag = 'input window, operand 1, single buffered']
    #allocation6 [shape = 's32[1]{0}', space=sflag, size = 0x4, scoped, tag = 'scoped memory for tpu_custom_call.1']
    #allocation7 [shape = 'u8[4096]{0}', space=vmem, size = 0x1000, scoped, tag = 'input window, operand 2, single buffered']
    #allocation8 [shape = 'u8[16384]{0}', space=vmem, size = 0x4000, scoped, tag = 'input window, operand 3, single buffered']
    #allocation9 [shape = 's32[1]{0}', space=sflag, size = 0x4, scoped, tag = 'scoped memory for tpu_custom_call.1']
    #allocation10 [shape = 'u8[16384]{0}', space=vmem, size = 0x4000, scoped, tag = 'input window, operand 4, single buffered']
    #allocation11 [shape = 'u8[131072]{0}', space=vmem, size = 0x20000, scoped, tag = 'input window, operand 5, single buffered']
    #allocation12 [shape = 's32[1]{0}', space=sflag, size = 0x4, scoped, tag = 'scoped memory for tpu_custom_call.1']
    #allocation13 [shape = 'u8[131072]{0}', space=vmem, size = 0x20000, scoped, tag = 'input window, operand 6, single buffered']
    #allocation14 [shape = 'u8[2048]{0}', space=vmem, size = 0x800, scoped, tag = 'input window, operand 7, single buffered']
    #allocation15 [shape = 's32[1]{0}', space=sflag, size = 0x4, scoped, tag = 'scoped memory for tpu_custom_call.1']
    #allocation16 [shape = 'u8[131072]{0}', space=vmem, size = 0x20000, scoped, tag = 'input window, operand 10, single buffered']
    #allocation17 [shape = 'u8[131072]{0}', space=vmem, size = 0x20000, scoped, tag = 'input window, operand 11, single buffered']
    #allocation18 [shape = 's32[1]{0}', space=sflag, size = 0x4, scoped, tag = 'scoped memory for tpu_custom_call.1']
    #allocation19 [shape = 'u8[8192]{0}', space=vmem, size = 0x2000, scoped, tag = 'output window, operand 0, single buffered']
    %18 = vsyncpa [#allocation3], 0
    %19 = vsyncpa [#allocation6], 0
    %20 = vsyncpa [#allocation9], 0
    %21 = vsyncpa [#allocation12], 0
    %22 = vsyncpa [#allocation15], 0
    %23 = vsyncpa [#allocation18], 0
    %24 = vsyncpa [#allocation4], 0
    // Predicated region
    $region2: #{tpu_custom_call.1} parent=1 // pred_check
      _
    $region3: #{tpu_custom_call.1} parent=1 // pred_check_branch
      %26 = sbr.rel (0) target = $region5
    $region4: #{tpu_custom_call.1} parent=1 // pred_region
      %s28 = ssub.s32 768, 768
      %29 = vsyncadd [#allocation3], %s28
      %s30 = sshll.u32 [#allocation2], 4
      %s31 = int_to_ptr.vmem [resolvable:$true] %s30
      %36 = dma.hbm_to_vmem [thread:$0]  %s0, 768, %s31, [#allocation3], 128, 128, 8
    $region5: #{tpu_custom_call.1} parent=1 // pred_fallthru
      _
    // Predicated region
    $region6: #{tpu_custom_call.1} parent=1 // pred_check
      _
    $region7: #{tpu_custom_call.1} parent=1 // pred_check_branch
      %38 = sbr.rel (0) target = $region9
    $region8: #{tpu_custom_call.1} parent=1 // pred_region
      %s40 = ssub.s32 128, 128
      %41 = vsyncadd [#allocation6], %s40
      %s43 = sshll.u32 [#allocation5], 4
      %s44 = int_to_ptr.vmem [resolvable:$true] %s43
      %46 = dma.hbm_to_vmem [thread:$0]  %s1, 128, %s44, [#allocation6]
    $region9: #{tpu_custom_call.1} parent=1 // pred_fallthru
      _
    // Predicated region
    $region10: #{tpu_custom_call.1} parent=1 // pred_check
      _
    $region11: #{tpu_custom_call.1} parent=1 // pred_check_branch
      %48 = sbr.rel (0) target = $region13
    $region12: #{tpu_custom_call.1} parent=1 // pred_region
      %s50 = ssub.s32 128, 128
      %51 = vsyncadd [#allocation6], %s50
      %s53 = sshll.u32 [#allocation7], 4
      %s54 = int_to_ptr.vmem [resolvable:$true] %s53
      %56 = dma.hbm_to_vmem [thread:$0]  %s2, 128, %s54, [#allocation6]
    $region13: #{tpu_custom_call.1} parent=1 // pred_fallthru
      _
    // Predicated region
    $region14: #{tpu_custom_call.1} parent=1 // pred_check
      _
    $region15: #{tpu_custom_call.1} parent=1 // pred_check_branch
      %58 = sbr.rel (0) target = $region17
    $region16: #{tpu_custom_call.1} parent=1 // pred_region
      %s60 = ssub.s32 512, 512
      %61 = vsyncadd [#allocation9], %s60
      %s62 = sshll.u32 [#allocation8], 4
      %s63 = int_to_ptr.vmem [resolvable:$true] %s62
      %68 = dma.hbm_to_vmem [thread:$0]  %s3, 512, %s63, [#allocation9], 128, 128, 8
    $region17: #{tpu_custom_call.1} parent=1 // pred_fallthru
      _
    // Predicated region
    $region18: #{tpu_custom_call.1} parent=1 // pred_check
      _
    $region19: #{tpu_custom_call.1} parent=1 // pred_check_branch
      %70 = sbr.rel (0) target = $region21
    $region20: #{tpu_custom_call.1} parent=1 // pred_region
      %s72 = ssub.s32 512, 512
      %73 = vsyncadd [#allocation9], %s72
      %s74 = sshll.u32 [#allocation10], 4
      %s75 = int_to_ptr.vmem [resolvable:$true] %s74
      %80 = dma.hbm_to_vmem [thread:$0]  %s4, 512, %s75, [#allocation9], 128, 128, 8
    $region21: #{tpu_custom_call.1} parent=1 // pred_fallthru
      _
    // Predicated region
    $region22: #{tpu_custom_call.1} parent=1 // pred_check
      _
    $region23: #{tpu_custom_call.1} parent=1 // pred_check_branch
      %82 = sbr.rel (0) target = $region25
    $region24: #{tpu_custom_call.1} parent=1 // pred_region
      %s84 = ssub.s32 4096, 4096
      %85 = vsyncadd [#allocation12], %s84
      %s86 = sshll.u32 [#allocation11], 4
      %s87 = int_to_ptr.vmem [resolvable:$true] %s86
      %92 = dma.hbm_to_vmem [thread:$0]  %s5, 4096, %s87, [#allocation12], 64, 64, 4
    $region25: #{tpu_custom_call.1} parent=1 // pred_fallthru
      _
    // Predicated region
    $region26: #{tpu_custom_call.1} parent=1 // pred_check
      _
    $region27: #{tpu_custom_call.1} parent=1 // pred_check_branch
      %94 = sbr.rel (0) target = $region29
    $region28: #{tpu_custom_call.1} parent=1 // pred_region
      %s96 = ssub.s32 4096, 4096
      %97 = vsyncadd [#allocation12], %s96
      %s98 = sshll.u32 [#allocation13], 4
      %s99 = int_to_ptr.vmem [resolvable:$true] %s98
      %104 = dma.hbm_to_vmem [thread:$0]  %s6, 4096, %s99, [#allocation12], 64, 64, 4
    $region29: #{tpu_custom_call.1} parent=1 // pred_fallthru
      _
    // Predicated region
    $region30: #{tpu_custom_call.1} parent=1 // pred_check
      _
    $region31: #{tpu_custom_call.1} parent=1 // pred_check_branch
      %106 = sbr.rel (0) target = $region33
    $region32: #{tpu_custom_call.1} parent=1 // pred_region
      %s108 = ssub.s32 64, 64
      %109 = vsyncadd [#allocation15], %s108
      %s110 = sshll.u32 [#allocation14], 4
      %s111 = int_to_ptr.vmem [resolvable:$true] %s110
      %116 = dma.hbm_to_vmem [thread:$0]  %s7, 64, %s111, [#allocation15], 16, 16, 1
    $region33: #{tpu_custom_call.1} parent=1 // pred_fallthru
      _
    // Predicated region
    $region34: #{tpu_custom_call.1} parent=1 // pred_check
      _
    $region35: #{tpu_custom_call.1} parent=1 // pred_check_branch
      %118 = sbr.rel (0) target = $region37
    $region36: #{tpu_custom_call.1} parent=1 // pred_region
      _
    $region37: #{tpu_custom_call.1} parent=1 // pred_fallthru
      _
    // Predicated region
    $region38: #{tpu_custom_call.1} parent=1 // pred_check
      _
    $region39: #{tpu_custom_call.1} parent=1 // pred_check_branch
      %120 = sbr.rel (0) target = $region41
    $region40: #{tpu_custom_call.1} parent=1 // pred_region
      _
    $region41: #{tpu_custom_call.1} parent=1 // pred_fallthru
      _
    // Predicated region
    $region42: #{tpu_custom_call.1} parent=1 // pred_check
      _
    $region43: #{tpu_custom_call.1} parent=1 // pred_check_branch
      %122 = sbr.rel (0) target = $region45
    $region44: #{tpu_custom_call.1} parent=1 // pred_region
      %s124 = ssub.s32 4096, 4096
      %125 = vsyncadd [#allocation15], %s124
      %s126 = sshll.u32 [#allocation16], 4
      %s127 = int_to_ptr.vmem [resolvable:$true] %s126
      %132 = dma.hbm_to_vmem [thread:$0]  %s10, 4096, %s127, [#allocation15], 128, 128, 8
    $region45: #{tpu_custom_call.1} parent=1 // pred_fallthru
      _
    // Predicated region
    $region46: #{tpu_custom_call.1} parent=1 // pred_check
      _
    $region47: #{tpu_custom_call.1} parent=1 // pred_check_branch
      %134 = sbr.rel (0) target = $region49
    $region48: #{tpu_custom_call.1} parent=1 // pred_region
      %s136 = ssub.s32 4096, 4096
      %137 = vsyncadd [#allocation18], %s136
      %s138 = sshll.u32 [#allocation17], 4
      %s139 = int_to_ptr.vmem [resolvable:$true] %s138
      %144 = dma.hbm_to_vmem [thread:$0]  %s11, 4096, %s139, [#allocation18], 128, 128, 8
    $region49: #{tpu_custom_call.1} parent=1 // pred_fallthru
      _
    // Predicated region
    $region50: #{tpu_custom_call.1} parent=1 // pred_check
      _
    $region51: #{tpu_custom_call.1} parent=1 // pred_check_branch
      %146 = sbr.rel (0) target = $region53
    $region52: #{tpu_custom_call.1} parent=1 // pred_region
      _
    $region53: #{tpu_custom_call.1} parent=1 // pred_fallthru
      _
    // Predicated region
    $region54: #{tpu_custom_call.1} parent=1 // pred_check
      _
    $region55: #{tpu_custom_call.1} parent=1 // pred_check_branch
      %148 = sbr.rel (0) target = $region57
    $region56: #{tpu_custom_call.1} parent=1 // pred_region
      %149 = dma.done [#allocation3], 768
    $region57: #{tpu_custom_call.1} parent=1 // pred_fallthru
      _
    // Predicated region
    $region58: #{tpu_custom_call.1} parent=1 // pred_check
      _
    $region59: #{tpu_custom_call.1} parent=1 // pred_check_branch
      %151 = sbr.rel (0) target = $region61
    $region60: #{tpu_custom_call.1} parent=1 // pred_region
      %152 = dma.done [#allocation6], 128
    $region61: #{tpu_custom_call.1} parent=1 // pred_fallthru
      _
    // Predicated region
    $region62: #{tpu_custom_call.1} parent=1 // pred_check
      _
    $region63: #{tpu_custom_call.1} parent=1 // pred_check_branch
      %154 = sbr.rel (0) target = $region65
    $region64: #{tpu_custom_call.1} parent=1 // pred_region
      %155 = dma.done [#allocation6], 128
    $region65: #{tpu_custom_call.1} parent=1 // pred_fallthru
      _
    // Predicated region
    $region66: #{tpu_custom_call.1} parent=1 // pred_check
      _
    $region67: #{tpu_custom_call.1} parent=1 // pred_check_branch
      %157 = sbr.rel (0) target = $region69
    $region68: #{tpu_custom_call.1} parent=1 // pred_region
      %158 = dma.done [#allocation9], 512
    $region69: #{tpu_custom_call.1} parent=1 // pred_fallthru
      _
    // Predicated region
    $region70: #{tpu_custom_call.1} parent=1 // pred_check
      _
    $region71: #{tpu_custom_call.1} parent=1 // pred_check_branch
      %160 = sbr.rel (0) target = $region73
    $region72: #{tpu_custom_call.1} parent=1 // pred_region
      %161 = dma.done [#allocation9], 512
    $region73: #{tpu_custom_call.1} parent=1 // pred_fallthru
      _
    // Predicated region
    $region74: #{tpu_custom_call.1} parent=1 // pred_check
      _
    $region75: #{tpu_custom_call.1} parent=1 // pred_check_branch
      %163 = sbr.rel (0) target = $region77
    $region76: #{tpu_custom_call.1} parent=1 // pred_region
      %164 = dma.done [#allocation12], 4096
    $region77: #{tpu_custom_call.1} parent=1 // pred_fallthru
      _
    // Predicated region
    $region78: #{tpu_custom_call.1} parent=1 // pred_check
      _
    $region79: #{tpu_custom_call.1} parent=1 // pred_check_branch
      %166 = sbr.rel (0) target = $region81
    $region80: #{tpu_custom_call.1} parent=1 // pred_region
      %167 = dma.done [#allocation12], 4096
    $region81: #{tpu_custom_call.1} parent=1 // pred_fallthru
      _
    // Predicated region
    $region82: #{tpu_custom_call.1} parent=1 // pred_check
      _
    $region83: #{tpu_custom_call.1} parent=1 // pred_check_branch
      %169 = sbr.rel (0) target = $region85
    $region84: #{tpu_custom_call.1} parent=1 // pred_region
      %170 = dma.done [#allocation15], 64
    $region85: #{tpu_custom_call.1} parent=1 // pred_fallthru
      _
    // Predicated region
    $region86: #{tpu_custom_call.1} parent=1 // pred_check
      _
    $region87: #{tpu_custom_call.1} parent=1 // pred_check_branch
      %172 = sbr.rel (0) target = $region89
    $region88: #{tpu_custom_call.1} parent=1 // pred_region
      %173 = dma.done [#allocation15], 4096
    $region89: #{tpu_custom_call.1} parent=1 // pred_fallthru
      _
    // Predicated region
    $region90: #{tpu_custom_call.1} parent=1 // pred_check
      _
    $region91: #{tpu_custom_call.1} parent=1 // pred_check_branch
      %175 = sbr.rel (0) target = $region93
    $region92: #{tpu_custom_call.1} parent=1 // pred_region
      %176 = dma.done [#allocation18], 4096
    $region93: #{tpu_custom_call.1} parent=1 // pred_fallthru
      _
    %v178 = vld [vmem:[#allocation2] sm:$0xff]
    %v179 = vld [vmem:[#allocation2 + $0x8] sm:$0xff]
    %v180 = vld [vmem:[#allocation2 + $0x10] sm:$0xff]
    %v181 = vld [vmem:[#allocation2 + $0x18] sm:$0xff]
    %v182 = vld [vmem:[#allocation2 + $0x20] sm:$0xff]
    %v183 = vld [vmem:[#allocation2 + $0x28] sm:$0xff]
    %v184 = vld [vmem:[#allocation5] sm:$0xff]
    %v185 = vpack.c.bf16 %v184, %v184
    %v186 = vld [vmem:[#allocation8] sm:$0xff]
    %vm187 = vcmask 392192
    %v189 = vsel %vm187, %v186, 0
    %191 = vmatprep.subr.mxu0 0.0
    %192 = vmatpush1.msra.mxu0 %v178
    %193 = vmatprep.subr.mxu0 0.0
    %194 = vmatpush1.msra.mxu0 %v179
    %195 = vmatprep.subr.mxu0 0.0
    %196 = vmatpush1.msra.mxu0 %v180
    %197 = vmatprep.subr.mxu0 0.0
    %198 = vmatpush1.msra.mxu0 %v181
    %199 = vmatprep.subr.mxu0 0.0
    %200 = vmatpush1.msra.mxu0 %v182
    %201 = vmatprep.subr.mxu0 0.0
    %202 = vmatpush1.msra.mxu0 %v183
    %203 = vmatprep.subr.mxu0 0.0
    %204 = vmatpush1.msra.mxu0 0.0
    %205 = vmatprep.subr.mxu0 0.0
    %206 = vmatpush1.msra.mxu0 0.0
    %207 = vmatprep.subr.mxu0 0.0
    %208 = vmatpush1.msra.mxu0 0.0
    %209 = vmatprep.subr.mxu0 0.0
    %210 = vmatpush1.msra.mxu0 0.0
    %211 = vmatprep.subr.mxu0 0.0
    %212 = vmatpush1.msra.mxu0 0.0
    %213 = vmatprep.subr.mxu0 0.0
    %214 = vmatpush1.msra.mxu0 0.0
    %215 = vmatprep.subr.mxu0 0.0
    %216 = vmatpush1.msra.mxu0 0.0
    %217 = vmatprep.subr.mxu0 0.0
    %218 = vmatpush1.msra.mxu0 0.0
    %219 = vmatprep.subr.mxu0 0.0
    %220 = vmatpush1.msra.mxu0 0.0
    %221 = vmatprep.subr.mxu0 0.0
    %222 = vmatpush1.msra.mxu0 0.0
    %223 = vmatprep.subr.mxu0 0.0
    %224 = vmatpush1.msra.mxu0 0.0
    %225 = vmatprep.subr.mxu0 0.0
    %226 = vmatpush1.msra.mxu0 0.0
    %227 = vmatprep.subr.mxu0 0.0
    %228 = vmatpush1.msra.mxu0 0.0
    %229 = vmatprep.subr.mxu0 0.0
    %230 = vmatpush1.msra.mxu0 0.0
    %231 = vmatprep.subr.mxu0 0.0
    %232 = vmatpush1.msra.mxu0 0.0
    %233 = vmatprep.subr.mxu0 0.0
    %234 = vmatpush1.msra.mxu0 0.0
    %235 = vmatprep.subr.mxu0 0.0
    %236 = vmatpush1.msra.mxu0 0.0
    %237 = vmatprep.subr.mxu0 0.0
    %238 = vmatpush1.msra.mxu0 0.0
    %239 = vmatprep.subr.mxu0 0.0
    %240 = vmatpush1.msra.mxu0 0.0
    %241 = vmatprep.subr.mxu0 0.0
    %242 = vmatpush1.msra.mxu0 0.0
    %243 = vmatprep.subr.mxu0 0.0
    %244 = vmatpush1.msra.mxu0 0.0
    %245 = vmatprep.subr.mxu0 0.0
    %246 = vmatpush1.msra.mxu0 0.0
    %247 = vmatprep.subr.mxu0 0.0
    %248 = vmatpush1.msra.mxu0 0.0
    %249 = vmatprep.subr.mxu0 0.0
    %250 = vmatpush1.msra.mxu0 0.0
    %251 = vmatprep.subr.mxu0 0.0
    %252 = vmatpush1.msra.mxu0 0.0
    %253 = vmatprep.subr.mxu0 0.0
    %254 = vmatpush1.msra.mxu0 0.0
    %255 = vmatprep.mubr.f32.mxu0 0.0
    %256 = vmatmul.mubr.f32.gmra.mrb[0].mxu0 %v189
    %v257 = vpop.f32.mrb[0].mxu0
    %v258 = vadd.f32 0.0, %v257
    %v259 = vpop.f32.mrb[0].mxu0
    %260 = vdwg.mxu0
    %v261 = vld [vmem:[#allocation13] sm:$0xf]
    %v262 = vld [vmem:[#allocation13 + $0x4] sm:$0xf]
    %v263 = vld [vmem:[#allocation13 + $0x8] sm:$0xf]
    %v264 = vld [vmem:[#allocation13 + $0xc] sm:$0xf]
    %v265 = vld [vmem:[#allocation13 + $0x10] sm:$0xf]
    %v266 = vld [vmem:[#allocation13 + $0x14] sm:$0xf]
    %v267 = vld [vmem:[#allocation13 + $0x18] sm:$0xf]
    %v268 = vld [vmem:[#allocation13 + $0x1c] sm:$0xf]
    %v269 = vld [vmem:[#allocation13 + $0x20] sm:$0xf]
    %v270 = vld [vmem:[#allocation13 + $0x24] sm:$0xf]
    %v271 = vld [vmem:[#allocation13 + $0x28] sm:$0xf]
    %v272 = vld [vmem:[#allocation13 + $0x2c] sm:$0xf]
    %v273 = vld [vmem:[#allocation13 + $0x30] sm:$0xf]
    %v274 = vld [vmem:[#allocation13 + $0x34] sm:$0xf]
    %v275 = vld [vmem:[#allocation13 + $0x38] sm:$0xf]
    %v276 = vld [vmem:[#allocation13 + $0x3c] sm:$0xf]
    %v277 = vld [vmem:[#allocation14] sm:$0x1]
    %v279 = vlaneseq
    %v280 = vshrl.u32 %v279, 7
    %v281 = vsub.s32 0, %v280
    %v282 = vrot.slane %v277, %v281
    %v300 = vunpack.c.l.b16 %v261
    %v301 = vunpack.c.l.b16 %v262
    %v302 = vunpack.c.l.b16 %v263
    %v303 = vunpack.c.l.b16 %v264
    %v304 = vunpack.c.l.b16 %v265
    %v305 = vunpack.c.l.b16 %v266
    %v306 = vunpack.c.l.b16 %v267
    %v307 = vunpack.c.l.b16 %v268
    %v308 = vunpack.c.l.b16 %v269
    %v309 = vunpack.c.l.b16 %v270
    %v310 = vunpack.c.l.b16 %v271
    %v311 = vunpack.c.l.b16 %v272
    %v312 = vunpack.c.l.b16 %v273
    %v313 = vunpack.c.l.b16 %v274
    %v314 = vunpack.c.l.b16 %v275
    %v315 = vunpack.c.l.b16 %v276
    %v316 = vpack.c.b16 %v301, %v300
    %v317 = vpack.c.b16 %v303, %v302
    %v318 = vpack.c.b16 %v305, %v304
    %v319 = vpack.c.b16 %v307, %v306
    %v320 = vpack.c.b16 %v309, %v308
    %v321 = vpack.c.b16 %v311, %v310
    %v322 = vpack.c.b16 %v313, %v312
    %v323 = vpack.c.b16 %v315, %v314
    %332 = vmatprep.subr.bf16.mxu0 0
    %333 = vmatpush1.bf16.msra.mxu0 %v316
    %334 = vmatprep.subr.bf16.mxu0 0
    %335 = vmatpush1.bf16.msra.mxu0 %v317
    %336 = vmatprep.subr.bf16.mxu0 0
    %337 = vmatpush1.bf16.msra.mxu0 %v318
    %338 = vmatprep.subr.bf16.mxu0 0
    %339 = vmatpush1.bf16.msra.mxu0 %v319
    %340 = vmatprep.subr.bf16.mxu0 0
    %341 = vmatpush1.bf16.msra.mxu0 %v320
    %342 = vmatprep.subr.bf16.mxu0 0
    %343 = vmatpush1.bf16.msra.mxu0 %v321
    %344 = vmatprep.subr.bf16.mxu0 0
    %345 = vmatpush1.bf16.msra.mxu0 %v322
    %346 = vmatprep.subr.bf16.mxu0 0
    %347 = vmatpush1.bf16.msra.mxu0 %v323
    %348 = vmatprep.subr.bf16.mxu0 0
    %349 = vmatpush1.bf16.msra.mxu0 0
    %350 = vmatprep.subr.bf16.mxu0 0
    %351 = vmatpush1.bf16.msra.mxu0 0
    %352 = vmatprep.subr.bf16.mxu0 0
    %353 = vmatpush1.bf16.msra.mxu0 0
    %354 = vmatprep.subr.bf16.mxu0 0
    %355 = vmatpush1.bf16.msra.mxu0 0
    %356 = vmatprep.subr.bf16.mxu0 0
    %357 = vmatpush1.bf16.msra.mxu0 0
    %358 = vmatprep.subr.bf16.mxu0 0
    %359 = vmatpush1.bf16.msra.mxu0 0
    %360 = vmatprep.subr.bf16.mxu0 0
    %361 = vmatpush1.bf16.msra.mxu0 0
    %362 = vmatprep.subr.bf16.mxu0 0
    %363 = vmatpush1.bf16.msra.mxu0 0
    %364 = vmatprep.mubr.bf16.mxu0 0
    %365 = vmatmul.mubr.bf16.gmra.mrb[0].mxu0 %v185
    %v366 = vpop.f32.mrb[0].mxu0
    %v367 = vadd.f32 %v282, %v366
    %v368 = vpop.f32.mrb[0].mxu0
    %v369 = vpop.f32.mrb[0].mxu0
    %v370 = vpop.f32.mrb[0].mxu0
    %371 = vdwg.mxu0
    %v372 = vpack.c.bf16 %v258, %v258
    %v373 = vld [vmem:[#allocation11] sm:$0xf]
    %v374 = vld [vmem:[#allocation11 + $0x4] sm:$0xf]
    %v375 = vld [vmem:[#allocation11 + $0x8] sm:$0xf]
    %v376 = vld [vmem:[#allocation11 + $0xc] sm:$0xf]
    %v377 = vld [vmem:[#allocation11 + $0x10] sm:$0xf]
    %v378 = vld [vmem:[#allocation11 + $0x14] sm:$0xf]
    %v379 = vld [vmem:[#allocation11 + $0x18] sm:$0xf]
    %v380 = vld [vmem:[#allocation11 + $0x1c] sm:$0xf]
    %v381 = vld [vmem:[#allocation11 + $0x20] sm:$0xf]
    %v382 = vld [vmem:[#allocation11 + $0x24] sm:$0xf]
    %v383 = vld [vmem:[#allocation11 + $0x28] sm:$0xf]
    %v384 = vld [vmem:[#allocation11 + $0x2c] sm:$0xf]
    %v385 = vld [vmem:[#allocation11 + $0x30] sm:$0xf]
    %v386 = vld [vmem:[#allocation11 + $0x34] sm:$0xf]
    %v387 = vld [vmem:[#allocation11 + $0x38] sm:$0xf]
    %v388 = vld [vmem:[#allocation11 + $0x3c] sm:$0xf]
    %v405 = vunpack.c.l.b16 %v373
    %v406 = vunpack.c.l.b16 %v374
    %v407 = vunpack.c.l.b16 %v375
    %v408 = vunpack.c.l.b16 %v376
    %v409 = vunpack.c.l.b16 %v377
    %v410 = vunpack.c.l.b16 %v378
    %v411 = vunpack.c.l.b16 %v379
    %v412 = vunpack.c.l.b16 %v380
    %v413 = vunpack.c.l.b16 %v381
    %v414 = vunpack.c.l.b16 %v382
    %v415 = vunpack.c.l.b16 %v383
    %v416 = vunpack.c.l.b16 %v384
    %v417 = vunpack.c.l.b16 %v385
    %v418 = vunpack.c.l.b16 %v386
    %v419 = vunpack.c.l.b16 %v387
    %v420 = vunpack.c.l.b16 %v388
    %v421 = vpack.c.b16 %v406, %v405
    %v422 = vpack.c.b16 %v408, %v407
    %v423 = vpack.c.b16 %v410, %v409
    %v424 = vpack.c.b16 %v412, %v411
    %v425 = vpack.c.b16 %v414, %v413
    %v426 = vpack.c.b16 %v416, %v415
    %v427 = vpack.c.b16 %v418, %v417
    %v428 = vpack.c.b16 %v420, %v419
    %437 = vmatprep.subr.bf16.mxu0 0
    %438 = vmatpush1.bf16.msra.mxu0 %v421
    %439 = vmatprep.subr.bf16.mxu0 0
    %440 = vmatpush1.bf16.msra.mxu0 %v422
    %441 = vmatprep.subr.bf16.mxu0 0
    %442 = vmatpush1.bf16.msra.mxu0 %v423
    %443 = vmatprep.subr.bf16.mxu0 0
    %444 = vmatpush1.bf16.msra.mxu0 %v424
    %445 = vmatprep.subr.bf16.mxu0 0
    %446 = vmatpush1.bf16.msra.mxu0 %v425
    %447 = vmatprep.subr.bf16.mxu0 0
    %448 = vmatpush1.bf16.msra.mxu0 %v426
    %449 = vmatprep.subr.bf16.mxu0 0
    %450 = vmatpush1.bf16.msra.mxu0 %v427
    %451 = vmatprep.subr.bf16.mxu0 0
    %452 = vmatpush1.bf16.msra.mxu0 %v428
    %453 = vmatprep.subr.bf16.mxu0 0
    %454 = vmatpush1.bf16.msra.mxu0 0
    %455 = vmatprep.subr.bf16.mxu0 0
    %456 = vmatpush1.bf16.msra.mxu0 0
    %457 = vmatprep.subr.bf16.mxu0 0
    %458 = vmatpush1.bf16.msra.mxu0 0
    %459 = vmatprep.subr.bf16.mxu0 0
    %460 = vmatpush1.bf16.msra.mxu0 0
    %461 = vmatprep.subr.bf16.mxu0 0
    %462 = vmatpush1.bf16.msra.mxu0 0
    %463 = vmatprep.subr.bf16.mxu0 0
    %464 = vmatpush1.bf16.msra.mxu0 0
    %465 = vmatprep.subr.bf16.mxu0 0
    %466 = vmatpush1.bf16.msra.mxu0 0
    %467 = vmatprep.subr.bf16.mxu0 0
    %468 = vmatpush1.bf16.msra.mxu0 0
    %469 = vmatprep.mubr.bf16.mxu0 0
    %470 = vmatmul.mubr.bf16.gmra.mrb[0].mxu0 %v372
    %v471 = vpop.f32.mrb[0].mxu0
    %v472 = vadd.f32 %v367, %v471
    %v473 = vpop.f32.mrb[0].mxu0
    %v474 = vpop.f32.mrb[0].mxu0
    %v475 = vpop.f32.mrb[0].mxu0
    %476 = vdwg.mxu0
    %vm477 = vcmp.gt.f32.partialorder %v472, 0.0
    %v478 = vmin.f32 %v472, 0.0
    %v479 = vmul.f32 %v478, 1.442695
    %v480 = vpow.pop %v479
    %v481 = vsub.f32 %v480, 1.0
    %v482 = vsel %vm477, %v472, %v481
    %v483 = vld [vmem:[#allocation10] sm:$0xff]
    %vm484 = vcmask 64512
    %v486 = vsel %vm484, %v483, 0
    %488 = vmatprep.subr.mxu0 0.0
    %489 = vmatpush1.msra.mxu0 %v482
    %490 = vmatprep.subr.mxu0 0.0
    %491 = vmatpush1.msra.mxu0 0.0
    %492 = vmatprep.subr.mxu0 0.0
    %493 = vmatpush1.msra.mxu0 0.0
    %494 = vmatprep.subr.mxu0 0.0
    %495 = vmatpush1.msra.mxu0 0.0
    %496 = vmatprep.subr.mxu0 0.0
    %497 = vmatpush1.msra.mxu0 0.0
    %498 = vmatprep.subr.mxu0 0.0
    %499 = vmatpush1.msra.mxu0 0.0
    %500 = vmatprep.subr.mxu0 0.0
    %501 = vmatpush1.msra.mxu0 0.0
    %502 = vmatprep.subr.mxu0 0.0
    %503 = vmatpush1.msra.mxu0 0.0
    %504 = vmatprep.subr.mxu0 0.0
    %505 = vmatpush1.msra.mxu0 0.0
    %506 = vmatprep.subr.mxu0 0.0
    %507 = vmatpush1.msra.mxu0 0.0
    %508 = vmatprep.subr.mxu0 0.0
    %509 = vmatpush1.msra.mxu0 0.0
    %510 = vmatprep.subr.mxu0 0.0
    %511 = vmatpush1.msra.mxu0 0.0
    %512 = vmatprep.subr.mxu0 0.0
    %513 = vmatpush1.msra.mxu0 0.0
    %514 = vmatprep.subr.mxu0 0.0
    %515 = vmatpush1.msra.mxu0 0.0
    %516 = vmatprep.subr.mxu0 0.0
    %517 = vmatpush1.msra.mxu0 0.0
    %518 = vmatprep.subr.mxu0 0.0
    %519 = vmatpush1.msra.mxu0 0.0
    %520 = vmatprep.subr.mxu0 0.0
    %521 = vmatpush1.msra.mxu0 0.0
    %522 = vmatprep.subr.mxu0 0.0
    %523 = vmatpush1.msra.mxu0 0.0
    %524 = vmatprep.subr.mxu0 0.0
    %525 = vmatpush1.msra.mxu0 0.0
    %526 = vmatprep.subr.mxu0 0.0
    %527 = vmatpush1.msra.mxu0 0.0
    %528 = vmatprep.subr.mxu0 0.0
    %529 = vmatpush1.msra.mxu0 0.0
    %530 = vmatprep.subr.mxu0 0.0
    %531 = vmatpush1.msra.mxu0 0.0
    %532 = vmatprep.subr.mxu0 0.0
    %533 = vmatpush1.msra.mxu0 0.0
    %534 = vmatprep.subr.mxu0 0.0
    %535 = vmatpush1.msra.mxu0 0.0
    %536 = vmatprep.subr.mxu0 0.0
    %537 = vmatpush1.msra.mxu0 0.0
    %538 = vmatprep.subr.mxu0 0.0
    %539 = vmatpush1.msra.mxu0 0.0
    %540 = vmatprep.subr.mxu0 0.0
    %541 = vmatpush1.msra.mxu0 0.0
    %542 = vmatprep.subr.mxu0 0.0
    %543 = vmatpush1.msra.mxu0 0.0
    %544 = vmatprep.subr.mxu0 0.0
    %545 = vmatpush1.msra.mxu0 0.0
    %546 = vmatprep.subr.mxu0 0.0
    %547 = vmatpush1.msra.mxu0 0.0
    %548 = vmatprep.subr.mxu0 0.0
    %549 = vmatpush1.msra.mxu0 0.0
    %550 = vmatprep.subr.mxu0 0.0
    %551 = vmatpush1.msra.mxu0 0.0
    %552 = vmatprep.mubr.f32.mxu0 0.0
    %553 = vmatmul.mubr.f32.gmra.mrb[0].mxu0 %v486
    %v554 = vpop.f32.mrb[0].mxu0
    %v555 = vadd.f32 0.0, %v554
    %v556 = vpop.f32.mrb[0].mxu0
    %557 = vdwg.mxu0
    %s558 = scalar_lea.vmem [#allocation8], 8
    %v559 = vld [vmem:[%s558] sm:$0xff]
    %v561 = vsel %vm187, %v559, 0
    %563 = vmatprep.subr.mxu0 0.0
    %564 = vmatpush1.msra.mxu0 %v178
    %565 = vmatprep.subr.mxu0 0.0
    %566 = vmatpush1.msra.mxu0 %v179
    %567 = vmatprep.subr.mxu0 0.0
    %568 = vmatpush1.msra.mxu0 %v180
    %569 = vmatprep.subr.mxu0 0.0
    %570 = vmatpush1.msra.mxu0 %v181
    %571 = vmatprep.subr.mxu0 0.0
    %572 = vmatpush1.msra.mxu0 %v182
    %573 = vmatprep.subr.mxu0 0.0
    %574 = vmatpush1.msra.mxu0 %v183
    %575 = vmatprep.subr.mxu0 0.0
    %576 = vmatpush1.msra.mxu0 0.0
    %577 = vmatprep.subr.mxu0 0.0
    %578 = vmatpush1.msra.mxu0 0.0
    %579 = vmatprep.subr.mxu0 0.0
    %580 = vmatpush1.msra.mxu0 0.0
    %581 = vmatprep.subr.mxu0 0.0
    %582 = vmatpush1.msra.mxu0 0.0
    %583 = vmatprep.subr.mxu0 0.0
    %584 = vmatpush1.msra.mxu0 0.0
    %585 = vmatprep.subr.mxu0 0.0
    %586 = vmatpush1.msra.mxu0 0.0
    %587 = vmatprep.subr.mxu0 0.0
    %588 = vmatpush1.msra.mxu0 0.0
    %589 = vmatprep.subr.mxu0 0.0
    %590 = vmatpush1.msra.mxu0 0.0
    %591 = vmatprep.subr.mxu0 0.0
    %592 = vmatpush1.msra.mxu0 0.0
    %593 = vmatprep.subr.mxu0 0.0
    %594 = vmatpush1.msra.mxu0 0.0
    %595 = vmatprep.subr.mxu0 0.0
    %596 = vmatpush1.msra.mxu0 0.0
    %597 = vmatprep.subr.mxu0 0.0
    %598 = vmatpush1.msra.mxu0 0.0
    %599 = vmatprep.subr.mxu0 0.0
    %600 = vmatpush1.msra.mxu0 0.0
    %601 = vmatprep.subr.mxu0 0.0
    %602 = vmatpush1.msra.mxu0 0.0
    %603 = vmatprep.subr.mxu0 0.0
    %604 = vmatpush1.msra.mxu0 0.0
    %605 = vmatprep.subr.mxu0 0.0
    %606 = vmatpush1.msra.mxu0 0.0
    %607 = vmatprep.subr.mxu0 0.0
    %608 = vmatpush1.msra.mxu0 0.0
    %609 = vmatprep.subr.mxu0 0.0
    %610 = vmatpush1.msra.mxu0 0.0
    %611 = vmatprep.subr.mxu0 0.0
    %612 = vmatpush1.msra.mxu0 0.0
    %613 = vmatprep.subr.mxu0 0.0
    %614 = vmatpush1.msra.mxu0 0.0
    %615 = vmatprep.subr.mxu0 0.0
    %616 = vmatpush1.msra.mxu0 0.0
    %617 = vmatprep.subr.mxu0 0.0
    %618 = vmatpush1.msra.mxu0 0.0
    %619 = vmatprep.subr.mxu0 0.0
    %620 = vmatpush1.msra.mxu0 0.0
    %621 = vmatprep.subr.mxu0 0.0
    %622 = vmatpush1.msra.mxu0 0.0
    %623 = vmatprep.subr.mxu0 0.0
    %624 = vmatpush1.msra.mxu0 0.0
    %625 = vmatprep.subr.mxu0 0.0
    %626 = vmatpush1.msra.mxu0 0.0
    %627 = vmatprep.mubr.f32.mxu0 0.0
    %628 = vmatmul.mubr.f32.gmra.mrb[0].mxu0 %v561
    %v629 = vpop.f32.mrb[0].mxu0
    %v630 = vadd.f32 0.0, %v629
    %v631 = vpop.f32.mrb[0].mxu0
    %632 = vdwg.mxu0
    %s633 = scalar_lea.vmem [#allocation13], 64
    %v634 = vld [vmem:[%s633] sm:$0xf]
    %v635 = vld [vmem:[%s633 + $0x4] sm:$0xf]
    %v636 = vld [vmem:[%s633 + $0x8] sm:$0xf]
    %v637 = vld [vmem:[%s633 + $0xc] sm:$0xf]
    %v638 = vld [vmem:[%s633 + $0x10] sm:$0xf]
    %v639 = vld [vmem:[%s633 + $0x14] sm:$0xf]
    %v640 = vld [vmem:[%s633 + $0x18] sm:$0xf]
    %v641 = vld [vmem:[%s633 + $0x1c] sm:$0xf]
    %v642 = vld [vmem:[%s633 + $0x20] sm:$0xf]
    %v643 = vld [vmem:[%s633 + $0x24] sm:$0xf]
    %v644 = vld [vmem:[%s633 + $0x28] sm:$0xf]
    %v645 = vld [vmem:[%s633 + $0x2c] sm:$0xf]
    %v646 = vld [vmem:[%s633 + $0x30] sm:$0xf]
    %v647 = vld [vmem:[%s633 + $0x34] sm:$0xf]
    %v648 = vld [vmem:[%s633 + $0x38] sm:$0xf]
    %v649 = vld [vmem:[%s633 + $0x3c] sm:$0xf]
    %s650 = scalar_lea.vmem [#allocation14], 1
    %v651 = vld [vmem:[%s650] sm:$0x1]
    %v653 = vlaneseq
    %v654 = vshrl.u32 %v653, 7
    %v655 = vsub.s32 0, %v654
    %v656 = vrot.slane %v651, %v655
    %v674 = vunpack.c.l.b16 %v634
    %v675 = vunpack.c.l.b16 %v635
    %v676 = vunpack.c.l.b16 %v636
    %v677 = vunpack.c.l.b16 %v637
    %v678 = vunpack.c.l.b16 %v638
    %v679 = vunpack.c.l.b16 %v639
    %v680 = vunpack.c.l.b16 %v640
    %v681 = vunpack.c.l.b16 %v641
    %v682 = vunpack.c.l.b16 %v642
    %v683 = vunpack.c.l.b16 %v643
    %v684 = vunpack.c.l.b16 %v644
    %v685 = vunpack.c.l.b16 %v645
    %v686 = vunpack.c.l.b16 %v646
    %v687 = vunpack.c.l.b16 %v647
    %v688 = vunpack.c.l.b16 %v648
    %v689 = vunpack.c.l.b16 %v649
    %v690 = vpack.c.b16 %v675, %v674
    %v691 = vpack.c.b16 %v677, %v676
    %v692 = vpack.c.b16 %v679, %v678
    %v693 = vpack.c.b16 %v681, %v680
    %v694 = vpack.c.b16 %v683, %v682
    %v695 = vpack.c.b16 %v685, %v684
    %v696 = vpack.c.b16 %v687, %v686
    %v697 = vpack.c.b16 %v689, %v688
    %706 = vmatprep.subr.bf16.mxu0 0
    %707 = vmatpush1.bf16.msra.mxu0 %v690
    %708 = vmatprep.subr.bf16.mxu0 0
    %709 = vmatpush1.bf16.msra.mxu0 %v691
    %710 = vmatprep.subr.bf16.mxu0 0
    %711 = vmatpush1.bf16.msra.mxu0 %v692
    %712 = vmatprep.subr.bf16.mxu0 0
    %713 = vmatpush1.bf16.msra.mxu0 %v693
    %714 = vmatprep.subr.bf16.mxu0 0
    %715 = vmatpush1.bf16.msra.mxu0 %v694
    %716 = vmatprep.subr.bf16.mxu0 0
    %717 = vmatpush1.bf16.msra.mxu0 %v695
    %718 = vmatprep.subr.bf16.mxu0 0
    %719 = vmatpush1.bf16.msra.mxu0 %v696
    %720 = vmatprep.subr.bf16.mxu0 0
    %721 = vmatpush1.bf16.msra.mxu0 %v697
    %722 = vmatprep.subr.bf16.mxu0 0
    %723 = vmatpush1.bf16.msra.mxu0 0
    %724 = vmatprep.subr.bf16.mxu0 0
    %725 = vmatpush1.bf16.msra.mxu0 0
    %726 = vmatprep.subr.bf16.mxu0 0
    %727 = vmatpush1.bf16.msra.mxu0 0
    %728 = vmatprep.subr.bf16.mxu0 0
    %729 = vmatpush1.bf16.msra.mxu0 0
    %730 = vmatprep.subr.bf16.mxu0 0
    %731 = vmatpush1.bf16.msra.mxu0 0
    %732 = vmatprep.subr.bf16.mxu0 0
    %733 = vmatpush1.bf16.msra.mxu0 0
    %734 = vmatprep.subr.bf16.mxu0 0
    %735 = vmatpush1.bf16.msra.mxu0 0
    %736 = vmatprep.subr.bf16.mxu0 0
    %737 = vmatpush1.bf16.msra.mxu0 0
    %738 = vmatprep.mubr.bf16.mxu0 0
    %739 = vmatmul.mubr.bf16.gmra.mrb[0].mxu0 %v185
    %v740 = vpop.f32.mrb[0].mxu0
    %v741 = vadd.f32 %v656, %v740
    %v742 = vpop.f32.mrb[0].mxu0
    %v743 = vpop.f32.mrb[0].mxu0
    %v744 = vpop.f32.mrb[0].mxu0
    %745 = vdwg.mxu0
    %v746 = vpack.c.bf16 %v630, %v630
    %s747 = scalar_lea.vmem [#allocation11], 64
    %v748 = vld [vmem:[%s747] sm:$0xf]
    %v749 = vld [vmem:[%s747 + $0x4] sm:$0xf]
    %v750 = vld [vmem:[%s747 + $0x8] sm:$0xf]
    %v751 = vld [vmem:[%s747 + $0xc] sm:$0xf]
    %v752 = vld [vmem:[%s747 + $0x10] sm:$0xf]
    %v753 = vld [vmem:[%s747 + $0x14] sm:$0xf]
    %v754 = vld [vmem:[%s747 + $0x18] sm:$0xf]
    %v755 = vld [vmem:[%s747 + $0x1c] sm:$0xf]
    %v756 = vld [vmem:[%s747 + $0x20] sm:$0xf]
    %v757 = vld [vmem:[%s747 + $0x24] sm:$0xf]
    %v758 = vld [vmem:[%s747 + $0x28] sm:$0xf]
    %v759 = vld [vmem:[%s747 + $0x2c] sm:$0xf]
    %v760 = vld [vmem:[%s747 + $0x30] sm:$0xf]
    %v761 = vld [vmem:[%s747 + $0x34] sm:$0xf]
    %v762 = vld [vmem:[%s747 + $0x38] sm:$0xf]
    %v763 = vld [vmem:[%s747 + $0x3c] sm:$0xf]
    %v780 = vunpack.c.l.b16 %v748
    %v781 = vunpack.c.l.b16 %v749
    %v782 = vunpack.c.l.b16 %v750
    %v783 = vunpack.c.l.b16 %v751
    %v784 = vunpack.c.l.b16 %v752
    %v785 = vunpack.c.l.b16 %v753
    %v786 = vunpack.c.l.b16 %v754
    %v787 = vunpack.c.l.b16 %v755
    %v788 = vunpack.c.l.b16 %v756
    %v789 = vunpack.c.l.b16 %v757
    %v790 = vunpack.c.l.b16 %v758
    %v791 = vunpack.c.l.b16 %v759
    %v792 = vunpack.c.l.b16 %v760
    %v793 = vunpack.c.l.b16 %v761
    %v794 = vunpack.c.l.b16 %v762
    %v795 = vunpack.c.l.b16 %v763
    %v796 = vpack.c.b16 %v781, %v780
    %v797 = vpack.c.b16 %v783, %v782
    %v798 = vpack.c.b16 %v785, %v784
    %v799 = vpack.c.b16 %v787, %v786
    %v800 = vpack.c.b16 %v789, %v788
    %v801 = vpack.c.b16 %v791, %v790
    %v802 = vpack.c.b16 %v793, %v792
    %v803 = vpack.c.b16 %v795, %v794
    %812 = vmatprep.subr.bf16.mxu0 0
    %813 = vmatpush1.bf16.msra.mxu0 %v796
    %814 = vmatprep.subr.bf16.mxu0 0
    %815 = vmatpush1.bf16.msra.mxu0 %v797
    %816 = vmatprep.subr.bf16.mxu0 0
    %817 = vmatpush1.bf16.msra.mxu0 %v798
    %818 = vmatprep.subr.bf16.mxu0 0
    %819 = vmatpush1.bf16.msra.mxu0 %v799
    %820 = vmatprep.subr.bf16.mxu0 0
    %821 = vmatpush1.bf16.msra.mxu0 %v800
    %822 = vmatprep.subr.bf16.mxu0 0
    %823 = vmatpush1.bf16.msra.mxu0 %v801
    %824 = vmatprep.subr.bf16.mxu0 0
    %825 = vmatpush1.bf16.msra.mxu0 %v802
    %826 = vmatprep.subr.bf16.mxu0 0
    %827 = vmatpush1.bf16.msra.mxu0 %v803
    %828 = vmatprep.subr.bf16.mxu0 0
    %829 = vmatpush1.bf16.msra.mxu0 0
    %830 = vmatprep.subr.bf16.mxu0 0
    %831 = vmatpush1.bf16.msra.mxu0 0
    %832 = vmatprep.subr.bf16.mxu0 0
    %833 = vmatpush1.bf16.msra.mxu0 0
    %834 = vmatprep.subr.bf16.mxu0 0
    %835 = vmatpush1.bf16.msra.mxu0 0
    %836 = vmatprep.subr.bf16.mxu0 0
    %837 = vmatpush1.bf16.msra.mxu0 0
    %838 = vmatprep.subr.bf16.mxu0 0
    %839 = vmatpush1.bf16.msra.mxu0 0
    %840 = vmatprep.subr.bf16.mxu0 0
    %841 = vmatpush1.bf16.msra.mxu0 0
    %842 = vmatprep.subr.bf16.mxu0 0
    %843 = vmatpush1.bf16.msra.mxu0 0
    %844 = vmatprep.mubr.bf16.mxu0 0
    %845 = vmatmul.mubr.bf16.gmra.mrb[0].mxu0 %v746
    %v846 = vpop.f32.mrb[0].mxu0
    %v847 = vadd.f32 %v741, %v846
    %v848 = vpop.f32.mrb[0].mxu0
    %v849 = vpop.f32.mrb[0].mxu0
    %v850 = vpop.f32.mrb[0].mxu0
    %851 = vdwg.mxu0
    %vm852 = vcmp.gt.f32.partialorder %v847, 0.0
    %v853 = vmin.f32 %v847, 0.0
    %v854 = vmul.f32 %v853, 1.442695
    %v855 = vpow.pop %v854
    %v856 = vsub.f32 %v855, 1.0
    %v857 = vsel %vm852, %v847, %v856
    %s858 = scalar_lea.vmem [#allocation10], 8
    %v859 = vld [vmem:[%s858] sm:$0xff]
    %v861 = vsel %vm484, %v859, 0
    %863 = vmatprep.subr.mxu0 0.0
    %864 = vmatpush1.msra.mxu0 %v857
    %865 = vmatprep.subr.mxu0 0.0
    %866 = vmatpush1.msra.mxu0 0.0
    %867 = vmatprep.subr.mxu0 0.0
    %868 = vmatpush1.msra.mxu0 0.0
    %869 = vmatprep.subr.mxu0 0.0
    %870 = vmatpush1.msra.mxu0 0.0
    %871 = vmatprep.subr.mxu0 0.0
    %872 = vmatpush1.msra.mxu0 0.0
    %873 = vmatprep.subr.mxu0 0.0
    %874 = vmatpush1.msra.mxu0 0.0
    %875 = vmatprep.subr.mxu0 0.0
    %876 = vmatpush1.msra.mxu0 0.0
    %877 = vmatprep.subr.mxu0 0.0
    %878 = vmatpush1.msra.mxu0 0.0
    %879 = vmatprep.subr.mxu0 0.0
    %880 = vmatpush1.msra.mxu0 0.0
    %881 = vmatprep.subr.mxu0 0.0
    %882 = vmatpush1.msra.mxu0 0.0
    %883 = vmatprep.subr.mxu0 0.0
    %884 = vmatpush1.msra.mxu0 0.0
    %885 = vmatprep.subr.mxu0 0.0
    %886 = vmatpush1.msra.mxu0 0.0
    %887 = vmatprep.subr.mxu0 0.0
    %888 = vmatpush1.msra.mxu0 0.0
    %889 = vmatprep.subr.mxu0 0.0
    %890 = vmatpush1.msra.mxu0 0.0
    %891 = vmatprep.subr.mxu0 0.0
    %892 = vmatpush1.msra.mxu0 0.0
    %893 = vmatprep.subr.mxu0 0.0
    %894 = vmatpush1.msra.mxu0 0.0
    %895 = vmatprep.subr.mxu0 0.0
    %896 = vmatpush1.msra.mxu0 0.0
    %897 = vmatprep.subr.mxu0 0.0
    %898 = vmatpush1.msra.mxu0 0.0
    %899 = vmatprep.subr.mxu0 0.0
    %900 = vmatpush1.msra.mxu0 0.0
    %901 = vmatprep.subr.mxu0 0.0
    %902 = vmatpush1.msra.mxu0 0.0
    %903 = vmatprep.subr.mxu0 0.0
    %904 = vmatpush1.msra.mxu0 0.0
    %905 = vmatprep.subr.mxu0 0.0
    %906 = vmatpush1.msra.mxu0 0.0
    %907 = vmatprep.subr.mxu0 0.0
    %908 = vmatpush1.msra.mxu0 0.0
    %909 = vmatprep.subr.mxu0 0.0
    %910 = vmatpush1.msra.mxu0 0.0
    %911 = vmatprep.subr.mxu0 0.0
    %912 = vmatpush1.msra.mxu0 0.0
    %913 = vmatprep.subr.mxu0 0.0
    %914 = vmatpush1.msra.mxu0 0.0
    %915 = vmatprep.subr.mxu0 0.0
    %916 = vmatpush1.msra.mxu0 0.0
    %917 = vmatprep.subr.mxu0 0.0
    %918 = vmatpush1.msra.mxu0 0.0
    %919 = vmatprep.subr.mxu0 0.0
    %920 = vmatpush1.msra.mxu0 0.0
    %921 = vmatprep.subr.mxu0 0.0
    %922 = vmatpush1.msra.mxu0 0.0
    %923 = vmatprep.subr.mxu0 0.0
    %924 = vmatpush1.msra.mxu0 0.0
    %925 = vmatprep.subr.mxu0 0.0
    %926 = vmatpush1.msra.mxu0 0.0
    %927 = vmatprep.mubr.f32.mxu0 0.0
    %928 = vmatmul.mubr.f32.gmra.mrb[0].mxu0 %v861
    %v929 = vpop.f32.mrb[0].mxu0
    %v930 = vadd.f32 0.0, %v929
    %v931 = vpop.f32.mrb[0].mxu0
    %932 = vdwg.mxu0
    %s933 = scalar_lea.vmem [#allocation8], 16
    %v934 = vld [vmem:[%s933] sm:$0xff]
    %v936 = vsel %vm187, %v934, 0
    %938 = vmatprep.subr.mxu0 0.0
    %939 = vmatpush1.msra.mxu0 %v178
    %940 = vmatprep.subr.mxu0 0.0
    %941 = vmatpush1.msra.mxu0 %v179
    %942 = vmatprep.subr.mxu0 0.0
    %943 = vmatpush1.msra.mxu0 %v180
    %944 = vmatprep.subr.mxu0 0.0
    %945 = vmatpush1.msra.mxu0 %v181
    %946 = vmatprep.subr.mxu0 0.0
    %947 = vmatpush1.msra.mxu0 %v182
    %948 = vmatprep.subr.mxu0 0.0
    %949 = vmatpush1.msra.mxu0 %v183
    %950 = vmatprep.subr.mxu0 0.0
    %951 = vmatpush1.msra.mxu0 0.0
    %952 = vmatprep.subr.mxu0 0.0
    %953 = vmatpush1.msra.mxu0 0.0
    %954 = vmatprep.subr.mxu0 0.0
    %955 = vmatpush1.msra.mxu0 0.0
    %956 = vmatprep.subr.mxu0 0.0
    %957 = vmatpush1.msra.mxu0 0.0
    %958 = vmatprep.subr.mxu0 0.0
    %959 = vmatpush1.msra.mxu0 0.0
    %960 = vmatprep.subr.mxu0 0.0
    %961 = vmatpush1.msra.mxu0 0.0
    %962 = vmatprep.subr.mxu0 0.0
    %963 = vmatpush1.msra.mxu0 0.0
    %964 = vmatprep.subr.mxu0 0.0
    %965 = vmatpush1.msra.mxu0 0.0
    %966 = vmatprep.subr.mxu0 0.0
    %967 = vmatpush1.msra.mxu0 0.0
    %968 = vmatprep.subr.mxu0 0.0
    %969 = vmatpush1.msra.mxu0 0.0
    %970 = vmatprep.subr.mxu0 0.0
    %971 = vmatpush1.msra.mxu0 0.0
    %972 = vmatprep.subr.mxu0 0.0
    %973 = vmatpush1.msra.mxu0 0.0
    %974 = vmatprep.subr.mxu0 0.0
    %975 = vmatpush1.msra.mxu0 0.0
    %976 = vmatprep.subr.mxu0 0.0
    %977 = vmatpush1.msra.mxu0 0.0
    %978 = vmatprep.subr.mxu0 0.0
    %979 = vmatpush1.msra.mxu0 0.0
    %980 = vmatprep.subr.mxu0 0.0
    %981 = vmatpush1.msra.mxu0 0.0
    %982 = vmatprep.subr.mxu0 0.0
    %983 = vmatpush1.msra.mxu0 0.0
    %984 = vmatprep.subr.mxu0 0.0
    %985 = vmatpush1.msra.mxu0 0.0
    %986 = vmatprep.subr.mxu0 0.0
    %987 = vmatpush1.msra.mxu0 0.0
    %988 = vmatprep.subr.mxu0 0.0
    %989 = vmatpush1.msra.mxu0 0.0
    %990 = vmatprep.subr.mxu0 0.0
    %991 = vmatpush1.msra.mxu0 0.0
    %992 = vmatprep.subr.mxu0 0.0
    %993 = vmatpush1.msra.mxu0 0.0
    %994 = vmatprep.subr.mxu0 0.0
    %995 = vmatpush1.msra.mxu0 0.0
    %996 = vmatprep.subr.mxu0 0.0
    %997 = vmatpush1.msra.mxu0 0.0
    %998 = vmatprep.subr.mxu0 0.0
    %999 = vmatpush1.msra.mxu0 0.0
    %1000 = vmatprep.subr.mxu0 0.0
    %1001 = vmatpush1.msra.mxu0 0.0
    %1002 = vmatprep.mubr.f32.mxu0 0.0
    %1003 = vmatmul.mubr.f32.gmra.mrb[0].mxu0 %v936
    %v1004 = vpop.f32.mrb[0].mxu0
    %v1005 = vadd.f32 0.0, %v1004
    %v1006 = vpop.f32.mrb[0].mxu0
    %1007 = vdwg.mxu0
    %s1008 = scalar_lea.vmem [#allocation13], 128
    %v1009 = vld [vmem:[%s1008] sm:$0xf]
    %v1010 = vld [vmem:[%s1008 + $0x4] sm:$0xf]
    %v1011 = vld [vmem:[%s1008 + $0x8] sm:$0xf]
    %v1012 = vld [vmem:[%s1008 + $0xc] sm:$0xf]
    %v1013 = vld [vmem:[%s1008 + $0x10] sm:$0xf]
    %v1014 = vld [vmem:[%s1008 + $0x14] sm:$0xf]
    %v1015 = vld [vmem:[%s1008 + $0x18] sm:$0xf]
    %v1016 = vld [vmem:[%s1008 + $0x1c] sm:$0xf]
    %v1017 = vld [vmem:[%s1008 + $0x20] sm:$0xf]
    %v1018 = vld [vmem:[%s1008 + $0x24] sm:$0xf]
    %v1019 = vld [vmem:[%s1008 + $0x28] sm:$0xf]
    %v1020 = vld [vmem:[%s1008 + $0x2c] sm:$0xf]
    %v1021 = vld [vmem:[%s1008 + $0x30] sm:$0xf]
    %v1022 = vld [vmem:[%s1008 + $0x34] sm:$0xf]
    %v1023 = vld [vmem:[%s1008 + $0x38] sm:$0xf]
    %v1024 = vld [vmem:[%s1008 + $0x3c] sm:$0xf]
    %s1025 = scalar_lea.vmem [#allocation14], 2
    %v1026 = vld [vmem:[%s1025] sm:$0x1]
    %v1028 = vlaneseq
    %v1029 = vshrl.u32 %v1028, 7
    %v1030 = vsub.s32 0, %v1029
    %v1031 = vrot.slane %v1026, %v1030
    %v1049 = vunpack.c.l.b16 %v1009
    %v1050 = vunpack.c.l.b16 %v1010
    %v1051 = vunpack.c.l.b16 %v1011
    %v1052 = vunpack.c.l.b16 %v1012
    %v1053 = vunpack.c.l.b16 %v1013
    %v1054 = vunpack.c.l.b16 %v1014
    %v1055 = vunpack.c.l.b16 %v1015
    %v1056 = vunpack.c.l.b16 %v1016
    %v1057 = vunpack.c.l.b16 %v1017
    %v1058 = vunpack.c.l.b16 %v1018
    %v1059 = vunpack.c.l.b16 %v1019
    %v1060 = vunpack.c.l.b16 %v1020
    %v1061 = vunpack.c.l.b16 %v1021
    %v1062 = vunpack.c.l.b16 %v1022
    %v1063 = vunpack.c.l.b16 %v1023
    %v1064 = vunpack.c.l.b16 %v1024
    %v1065 = vpack.c.b16 %v1050, %v1049
    %v1066 = vpack.c.b16 %v1052, %v1051
    %v1067 = vpack.c.b16 %v1054, %v1053
    %v1068 = vpack.c.b16 %v1056, %v1055
    %v1069 = vpack.c.b16 %v1058, %v1057
    %v1070 = vpack.c.b16 %v1060, %v1059
    %v1071 = vpack.c.b16 %v1062, %v1061
    %v1072 = vpack.c.b16 %v1064, %v1063
    %1081 = vmatprep.subr.bf16.mxu0 0
    %1082 = vmatpush1.bf16.msra.mxu0 %v1065
    %1083 = vmatprep.subr.bf16.mxu0 0
    %1084 = vmatpush1.bf16.msra.mxu0 %v1066
    %1085 = vmatprep.subr.bf16.mxu0 0
    %1086 = vmatpush1.bf16.msra.mxu0 %v1067
    %1087 = vmatprep.subr.bf16.mxu0 0
    %1088 = vmatpush1.bf16.msra.mxu0 %v1068
    %1089 = vmatprep.subr.bf16.mxu0 0
    %1090 = vmatpush1.bf16.msra.mxu0 %v1069
    %1091 = vmatprep.subr.bf16.mxu0 0
    %1092 = vmatpush1.bf16.msra.mxu0 %v1070
    %1093 = vmatprep.subr.bf16.mxu0 0
    %1094 = vmatpush1.bf16.msra.mxu0 %v1071
    %1095 = vmatprep.subr.bf16.mxu0 0
    %1096 = vmatpush1.bf16.msra.mxu0 %v1072
    %1097 = vmatprep.subr.bf16.mxu0 0
    %1098 = vmatpush1.bf16.msra.mxu0 0
    %1099 = vmatprep.subr.bf16.mxu0 0
    %1100 = vmatpush1.bf16.msra.mxu0 0
    %1101 = vmatprep.subr.bf16.mxu0 0
    %1102 = vmatpush1.bf16.msra.mxu0 0
    %1103 = vmatprep.subr.bf16.mxu0 0
    %1104 = vmatpush1.bf16.msra.mxu0 0
    %1105 = vmatprep.subr.bf16.mxu0 0
    %1106 = vmatpush1.bf16.msra.mxu0 0
    %1107 = vmatprep.subr.bf16.mxu0 0
    %1108 = vmatpush1.bf16.msra.mxu0 0
    %1109 = vmatprep.subr.bf16.mxu0 0
    %1110 = vmatpush1.bf16.msra.mxu0 0
    %1111 = vmatprep.subr.bf16.mxu0 0
    %1112 = vmatpush1.bf16.msra.mxu0 0
    %1113 = vmatprep.mubr.bf16.mxu0 0
    %1114 = vmatmul.mubr.bf16.gmra.mrb[0].mxu0 %v185
    %v1115 = vpop.f32.mrb[0].mxu0
    %v1116 = vadd.f32 %v1031, %v1115
    %v1117 = vpop.f32.mrb[0].mxu0
    %v1118 = vpop.f32.mrb[0].mxu0
    %v1119 = vpop.f32.mrb[0].mxu0
    %1120 = vdwg.mxu0
    %v1121 = vpack.c.bf16 %v1005, %v1005
    %s1122 = scalar_lea.vmem [#allocation11], 128
    %v1123 = vld [vmem:[%s1122] sm:$0xf]
    %v1124 = vld [vmem:[%s1122 + $0x4] sm:$0xf]
    %v1125 = vld [vmem:[%s1122 + $0x8] sm:$0xf]
    %v1126 = vld [vmem:[%s1122 + $0xc] sm:$0xf]
    %v1127 = vld [vmem:[%s1122 + $0x10] sm:$0xf]
    %v1128 = vld [vmem:[%s1122 + $0x14] sm:$0xf]
    %v1129 = vld [vmem:[%s1122 + $0x18] sm:$0xf]
    %v1130 = vld [vmem:[%s1122 + $0x1c] sm:$0xf]
    %v1131 = vld [vmem:[%s1122 + $0x20] sm:$0xf]
    %v1132 = vld [vmem:[%s1122 + $0x24] sm:$0xf]
    %v1133 = vld [vmem:[%s1122 + $0x28] sm:$0xf]
    %v1134 = vld [vmem:[%s1122 + $0x2c] sm:$0xf]
    %v1135 = vld [vmem:[%s1122 + $0x30] sm:$0xf]
    %v1136 = vld [vmem:[%s1122 + $0x34] sm:$0xf]
    %v1137 = vld [vmem:[%s1122 + $0x38] sm:$0xf]
    %v1138 = vld [vmem:[%s1122 + $0x3c] sm:$0xf]
    %v1155 = vunpack.c.l.b16 %v1123
    %v1156 = vunpack.c.l.b16 %v1124
    %v1157 = vunpack.c.l.b16 %v1125
    %v1158 = vunpack.c.l.b16 %v1126
    %v1159 = vunpack.c.l.b16 %v1127
    %v1160 = vunpack.c.l.b16 %v1128
    %v1161 = vunpack.c.l.b16 %v1129
    %v1162 = vunpack.c.l.b16 %v1130
    %v1163 = vunpack.c.l.b16 %v1131
    %v1164 = vunpack.c.l.b16 %v1132
    %v1165 = vunpack.c.l.b16 %v1133
    %v1166 = vunpack.c.l.b16 %v1134
    %v1167 = vunpack.c.l.b16 %v1135
    %v1168 = vunpack.c.l.b16 %v1136
    %v1169 = vunpack.c.l.b16 %v1137
    %v1170 = vunpack.c.l.b16 %v1138
    %v1171 = vpack.c.b16 %v1156, %v1155
    %v1172 = vpack.c.b16 %v1158, %v1157
    %v1173 = vpack.c.b16 %v1160, %v1159
    %v1174 = vpack.c.b16 %v1162, %v1161
    %v1175 = vpack.c.b16 %v1164, %v1163
    %v1176 = vpack.c.b16 %v1166, %v1165
    %v1177 = vpack.c.b16 %v1168, %v1167
    %v1178 = vpack.c.b16 %v1170, %v1169
    %1187 = vmatprep.subr.bf16.mxu0 0
    %1188 = vmatpush1.bf16.msra.mxu0 %v1171
    %1189 = vmatprep.subr.bf16.mxu0 0
    %1190 = vmatpush1.bf16.msra.mxu0 %v1172
    %1191 = vmatprep.subr.bf16.mxu0 0
    %1192 = vmatpush1.bf16.msra.mxu0 %v1173
    %1193 = vmatprep.subr.bf16.mxu0 0
    %1194 = vmatpush1.bf16.msra.mxu0 %v1174
    %1195 = vmatprep.subr.bf16.mxu0 0
    %1196 = vmatpush1.bf16.msra.mxu0 %v1175
    %1197 = vmatprep.subr.bf16.mxu0 0
    %1198 = vmatpush1.bf16.msra.mxu0 %v1176
    %1199 = vmatprep.subr.bf16.mxu0 0
    %1200 = vmatpush1.bf16.msra.mxu0 %v1177
    %1201 = vmatprep.subr.bf16.mxu0 0
    %1202 = vmatpush1.bf16.msra.mxu0 %v1178
    %1203 = vmatprep.subr.bf16.mxu0 0
    %1204 = vmatpush1.bf16.msra.mxu0 0
    %1205 = vmatprep.subr.bf16.mxu0 0
    %1206 = vmatpush1.bf16.msra.mxu0 0
    %1207 = vmatprep.subr.bf16.mxu0 0
    %1208 = vmatpush1.bf16.msra.mxu0 0
    %1209 = vmatprep.subr.bf16.mxu0 0
    %1210 = vmatpush1.bf16.msra.mxu0 0
    %1211 = vmatprep.subr.bf16.mxu0 0
    %1212 = vmatpush1.bf16.msra.mxu0 0
    %1213 = vmatprep.subr.bf16.mxu0 0
    %1214 = vmatpush1.bf16.msra.mxu0 0
    %1215 = vmatprep.subr.bf16.mxu0 0
    %1216 = vmatpush1.bf16.msra.mxu0 0
    %1217 = vmatprep.subr.bf16.mxu0 0
    %1218 = vmatpush1.bf16.msra.mxu0 0
    %1219 = vmatprep.mubr.bf16.mxu0 0
    %1220 = vmatmul.mubr.bf16.gmra.mrb[0].mxu0 %v1121
    %v1221 = vpop.f32.mrb[0].mxu0
    %v1222 = vadd.f32 %v1116, %v1221
    %v1223 = vpop.f32.mrb[0].mxu0
    %v1224 = vpop.f32.mrb[0].mxu0
    %v1225 = vpop.f32.mrb[0].mxu0
    %1226 = vdwg.mxu0
    %vm1227 = vcmp.gt.f32.partialorder %v1222, 0.0
    %v1228 = vmin.f32 %v1222, 0.0
    %v1229 = vmul.f32 %v1228, 1.442695
    %v1230 = vpow.pop %v1229
    %v1231 = vsub.f32 %v1230, 1.0
    %v1232 = vsel %vm1227, %v1222, %v1231
    %s1233 = scalar_lea.vmem [#allocation10], 16
    %v1234 = vld [vmem:[%s1233] sm:$0xff]
    %v1236 = vsel %vm484, %v1234, 0
    %1238 = vmatprep.subr.mxu0 0.0
    %1239 = vmatpush1.msra.mxu0 %v1232
    %1240 = vmatprep.subr.mxu0 0.0
    %1241 = vmatpush1.msra.mxu0 0.0
    %1242 = vmatprep.subr.mxu0 0.0
    %1243 = vmatpush1.msra.mxu0 0.0
    %1244 = vmatprep.subr.mxu0 0.0
    %1245 = vmatpush1.msra.mxu0 0.0
    %1246 = vmatprep.subr.mxu0 0.0
    %1247 = vmatpush1.msra.mxu0 0.0
    %1248 = vmatprep.subr.mxu0 0.0
    %1249 = vmatpush1.msra.mxu0 0.0
    %1250 = vmatprep.subr.mxu0 0.0
    %1251 = vmatpush1.msra.mxu0 0.0
    %1252 = vmatprep.subr.mxu0 0.0
    %1253 = vmatpush1.msra.mxu0 0.0
    %1254 = vmatprep.subr.mxu0 0.0
    %1255 = vmatpush1.msra.mxu0 0.0
    %1256 = vmatprep.subr.mxu0 0.0
    %1257 = vmatpush1.msra.mxu0 0.0
    %1258 = vmatprep.subr.mxu0 0.0
    %1259 = vmatpush1.msra.mxu0 0.0
    %1260 = vmatprep.subr.mxu0 0.0
    %1261 = vmatpush1.msra.mxu0 0.0
    %1262 = vmatprep.subr.mxu0 0.0
    %1263 = vmatpush1.msra.mxu0 0.0
    %1264 = vmatprep.subr.mxu0 0.0
    %1265 = vmatpush1.msra.mxu0 0.0
    %1266 = vmatprep.subr.mxu0 0.0
    %1267 = vmatpush1.msra.mxu0 0.0
    %1268 = vmatprep.subr.mxu0 0.0
    %1269 = vmatpush1.msra.mxu0 0.0
    %1270 = vmatprep.subr.mxu0 0.0
    %1271 = vmatpush1.msra.mxu0 0.0
    %1272 = vmatprep.subr.mxu0 0.0
    %1273 = vmatpush1.msra.mxu0 0.0
    %1274 = vmatprep.subr.mxu0 0.0
    %1275 = vmatpush1.msra.mxu0 0.0
    %1276 = vmatprep.subr.mxu0 0.0
    %1277 = vmatpush1.msra.mxu0 0.0
    %1278 = vmatprep.subr.mxu0 0.0
    %1279 = vmatpush1.msra.mxu0 0.0
    %1280 = vmatprep.subr.mxu0 0.0
    %1281 = vmatpush1.msra.mxu0 0.0
    %1282 = vmatprep.subr.mxu0 0.0
    %1283 = vmatpush1.msra.mxu0 0.0
    %1284 = vmatprep.subr.mxu0 0.0
    %1285 = vmatpush1.msra.mxu0 0.0
    %1286 = vmatprep.subr.mxu0 0.0
    %1287 = vmatpush1.msra.mxu0 0.0
    %1288 = vmatprep.subr.mxu0 0.0
    %1289 = vmatpush1.msra.mxu0 0.0
    %1290 = vmatprep.subr.mxu0 0.0
    %1291 = vmatpush1.msra.mxu0 0.0
    %1292 = vmatprep.subr.mxu0 0.0
    %1293 = vmatpush1.msra.mxu0 0.0
    %1294 = vmatprep.subr.mxu0 0.0
    %1295 = vmatpush1.msra.mxu0 0.0
    %1296 = vmatprep.subr.mxu0 0.0
    %1297 = vmatpush1.msra.mxu0 0.0
    %1298 = vmatprep.subr.mxu0 0.0
    %1299 = vmatpush1.msra.mxu0 0.0
    %1300 = vmatprep.subr.mxu0 0.0
    %1301 = vmatpush1.msra.mxu0 0.0
    %1302 = vmatprep.mubr.f32.mxu0 0.0
    %1303 = vmatmul.mubr.f32.gmra.mrb[0].mxu0 %v1236
    %v1304 = vpop.f32.mrb[0].mxu0
    %v1305 = vadd.f32 0.0, %v1304
    %v1306 = vpop.f32.mrb[0].mxu0
    %1307 = vdwg.mxu0
    %s1308 = scalar_lea.vmem [#allocation8], 24
    %v1309 = vld [vmem:[%s1308] sm:$0xff]
    %v1311 = vsel %vm187, %v1309, 0
    %1313 = vmatprep.subr.mxu0 0.0
    %1314 = vmatpush1.msra.mxu0 %v178
    %1315 = vmatprep.subr.mxu0 0.0
    %1316 = vmatpush1.msra.mxu0 %v179
    %1317 = vmatprep.subr.mxu0 0.0
    %1318 = vmatpush1.msra.mxu0 %v180
    %1319 = vmatprep.subr.mxu0 0.0
    %1320 = vmatpush1.msra.mxu0 %v181
    %1321 = vmatprep.subr.mxu0 0.0
    %1322 = vmatpush1.msra.mxu0 %v182
    %1323 = vmatprep.subr.mxu0 0.0
    %1324 = vmatpush1.msra.mxu0 %v183
    %1325 = vmatprep.subr.mxu0 0.0
    %1326 = vmatpush1.msra.mxu0 0.0
    %1327 = vmatprep.subr.mxu0 0.0
    %1328 = vmatpush1.msra.mxu0 0.0
    %1329 = vmatprep.subr.mxu0 0.0
    %1330 = vmatpush1.msra.mxu0 0.0
    %1331 = vmatprep.subr.mxu0 0.0
    %1332 = vmatpush1.msra.mxu0 0.0
    %1333 = vmatprep.subr.mxu0 0.0
    %1334 = vmatpush1.msra.mxu0 0.0
    %1335 = vmatprep.subr.mxu0 0.0
    %1336 = vmatpush1.msra.mxu0 0.0
    %1337 = vmatprep.subr.mxu0 0.0
    %1338 = vmatpush1.msra.mxu0 0.0
    %1339 = vmatprep.subr.mxu0 0.0
    %1340 = vmatpush1.msra.mxu0 0.0
    %1341 = vmatprep.subr.mxu0 0.0
    %1342 = vmatpush1.msra.mxu0 0.0
    %1343 = vmatprep.subr.mxu0 0.0
    %1344 = vmatpush1.msra.mxu0 0.0
    %1345 = vmatprep.subr.mxu0 0.0
    %1346 = vmatpush1.msra.mxu0 0.0
    %1347 = vmatprep.subr.mxu0 0.0
    %1348 = vmatpush1.msra.mxu0 0.0
    %1349 = vmatprep.subr.mxu0 0.0
    %1350 = vmatpush1.msra.mxu0 0.0
    %1351 = vmatprep.subr.mxu0 0.0
    %1352 = vmatpush1.msra.mxu0 0.0
    %1353 = vmatprep.subr.mxu0 0.0
    %1354 = vmatpush1.msra.mxu0 0.0
    %1355 = vmatprep.subr.mxu0 0.0
    %1356 = vmatpush1.msra.mxu0 0.0
    %1357 = vmatprep.subr.mxu0 0.0
    %1358 = vmatpush1.msra.mxu0 0.0
    %1359 = vmatprep.subr.mxu0 0.0
    %1360 = vmatpush1.msra.mxu0 0.0
    %1361 = vmatprep.subr.mxu0 0.0
    %1362 = vmatpush1.msra.mxu0 0.0
    %1363 = vmatprep.subr.mxu0 0.0
    %1364 = vmatpush1.msra.mxu0 0.0
    %1365 = vmatprep.subr.mxu0 0.0
    %1366 = vmatpush1.msra.mxu0 0.0
    %1367 = vmatprep.subr.mxu0 0.0
    %1368 = vmatpush1.msra.mxu0 0.0
    %1369 = vmatprep.subr.mxu0 0.0
    %1370 = vmatpush1.msra.mxu0 0.0
    %1371 = vmatprep.subr.mxu0 0.0
    %1372 = vmatpush1.msra.mxu0 0.0
    %1373 = vmatprep.subr.mxu0 0.0
    %1374 = vmatpush1.msra.mxu0 0.0
    %1375 = vmatprep.subr.mxu0 0.0
    %1376 = vmatpush1.msra.mxu0 0.0
    %1377 = vmatprep.mubr.f32.mxu0 0.0
    %1378 = vmatmul.mubr.f32.gmra.mrb[0].mxu0 %v1311
    %v1379 = vpop.f32.mrb[0].mxu0
    %v1380 = vadd.f32 0.0, %v1379
    %v1381 = vpop.f32.mrb[0].mxu0
    %1382 = vdwg.mxu0
    %s1383 = scalar_lea.vmem [#allocation13], 192
    %v1384 = vld [vmem:[%s1383] sm:$0xf]
    %v1385 = vld [vmem:[%s1383 + $0x4] sm:$0xf]
    %v1386 = vld [vmem:[%s1383 + $0x8] sm:$0xf]
    %v1387 = vld [vmem:[%s1383 + $0xc] sm:$0xf]
    %v1388 = vld [vmem:[%s1383 + $0x10] sm:$0xf]
    %v1389 = vld [vmem:[%s1383 + $0x14] sm:$0xf]
    %v1390 = vld [vmem:[%s1383 + $0x18] sm:$0xf]
    %v1391 = vld [vmem:[%s1383 + $0x1c] sm:$0xf]
    %v1392 = vld [vmem:[%s1383 + $0x20] sm:$0xf]
    %v1393 = vld [vmem:[%s1383 + $0x24] sm:$0xf]
    %v1394 = vld [vmem:[%s1383 + $0x28] sm:$0xf]
    %v1395 = vld [vmem:[%s1383 + $0x2c] sm:$0xf]
    %v1396 = vld [vmem:[%s1383 + $0x30] sm:$0xf]
    %v1397 = vld [vmem:[%s1383 + $0x34] sm:$0xf]
    %v1398 = vld [vmem:[%s1383 + $0x38] sm:$0xf]
    %v1399 = vld [vmem:[%s1383 + $0x3c] sm:$0xf]
    %s1400 = scalar_lea.vmem [#allocation14], 3
    %v1401 = vld [vmem:[%s1400] sm:$0x1]
    %v1403 = vlaneseq
    %v1404 = vshrl.u32 %v1403, 7
    %v1405 = vsub.s32 0, %v1404
    %v1406 = vrot.slane %v1401, %v1405
    %v1424 = vunpack.c.l.b16 %v1384
    %v1425 = vunpack.c.l.b16 %v1385
    %v1426 = vunpack.c.l.b16 %v1386
    %v1427 = vunpack.c.l.b16 %v1387
    %v1428 = vunpack.c.l.b16 %v1388
    %v1429 = vunpack.c.l.b16 %v1389
    %v1430 = vunpack.c.l.b16 %v1390
    %v1431 = vunpack.c.l.b16 %v1391
    %v1432 = vunpack.c.l.b16 %v1392
    %v1433 = vunpack.c.l.b16 %v1393
    %v1434 = vunpack.c.l.b16 %v1394
    %v1435 = vunpack.c.l.b16 %v1395
    %v1436 = vunpack.c.l.b16 %v1396
    %v1437 = vunpack.c.l.b16 %v1397
    %v1438 = vunpack.c.l.b16 %v1398
    %v1439 = vunpack.c.l.b16 %v1399
    %v1440 = vpack.c.b16 %v1425, %v1424
    %v1441 = vpack.c.b16 %v1427, %v1426
    %v1442 = vpack.c.b16 %v1429, %v1428
    %v1443 = vpack.c.b16 %v1431, %v1430
    %v1444 = vpack.c.b16 %v1433, %v1432
    %v1445 = vpack.c.b16 %v1435, %v1434
    %v1446 = vpack.c.b16 %v1437, %v1436
    %v1447 = vpack.c.b16 %v1439, %v1438
    %1456 = vmatprep.subr.bf16.mxu0 0
    %1457 = vmatpush1.bf16.msra.mxu0 %v1440
    %1458 = vmatprep.subr.bf16.mxu0 0
    %1459 = vmatpush1.bf16.msra.mxu0 %v1441
    %1460 = vmatprep.subr.bf16.mxu0 0
    %1461 = vmatpush1.bf16.msra.mxu0 %v1442
    %1462 = vmatprep.subr.bf16.mxu0 0
    %1463 = vmatpush1.bf16.msra.mxu0 %v1443
    %1464 = vmatprep.subr.bf16.mxu0 0
    %1465 = vmatpush1.bf16.msra.mxu0 %v1444
    %1466 = vmatprep.subr.bf16.mxu0 0
    %1467 = vmatpush1.bf16.msra.mxu0 %v1445
    %1468 = vmatprep.subr.bf16.mxu0 0
    %1469 = vmatpush1.bf16.msra.mxu0 %v1446
    %1470 = vmatprep.subr.bf16.mxu0 0
    %1471 = vmatpush1.bf16.msra.mxu0 %v1447
    %1472 = vmatprep.subr.bf16.mxu0 0
    %1473 = vmatpush1.bf16.msra.mxu0 0
    %1474 = vmatprep.subr.bf16.mxu0 0
    %1475 = vmatpush1.bf16.msra.mxu0 0
    %1476 = vmatprep.subr.bf16.mxu0 0
    %1477 = vmatpush1.bf16.msra.mxu0 0
    %1478 = vmatprep.subr.bf16.mxu0 0
    %1479 = vmatpush1.bf16.msra.mxu0 0
    %1480 = vmatprep.subr.bf16.mxu0 0
    %1481 = vmatpush1.bf16.msra.mxu0 0
    %1482 = vmatprep.subr.bf16.mxu0 0
    %1483 = vmatpush1.bf16.msra.mxu0 0
    %1484 = vmatprep.subr.bf16.mxu0 0
    %1485 = vmatpush1.bf16.msra.mxu0 0
    %1486 = vmatprep.subr.bf16.mxu0 0
    %1487 = vmatpush1.bf16.msra.mxu0 0
    %1488 = vmatprep.mubr.bf16.mxu0 0
    %1489 = vmatmul.mubr.bf16.gmra.mrb[0].mxu0 %v185
    %v1490 = vpop.f32.mrb[0].mxu0
    %v1491 = vadd.f32 %v1406, %v1490
    %v1492 = vpop.f32.mrb[0].mxu0
    %v1493 = vpop.f32.mrb[0].mxu0
    %v1494 = vpop.f32.mrb[0].mxu0
    %1495 = vdwg.mxu0
    %v1496 = vpack.c.bf16 %v1380, %v1380
    %s1497 = scalar_lea.vmem [#allocation11], 192
    %v1498 = vld [vmem:[%s1497] sm:$0xf]
    %v1499 = vld [vmem:[%s1497 + $0x4] sm:$0xf]
    %v1500 = vld [vmem:[%s1497 + $0x8] sm:$0xf]
    %v1501 = vld [vmem:[%s1497 + $0xc] sm:$0xf]
    %v1502 = vld [vmem:[%s1497 + $0x10] sm:$0xf]
    %v1503 = vld [vmem:[%s1497 + $0x14] sm:$0xf]
    %v1504 = vld [vmem:[%s1497 + $0x18] sm:$0xf]
    %v1505 = vld [vmem:[%s1497 + $0x1c] sm:$0xf]
    %v1506 = vld [vmem:[%s1497 + $0x20] sm:$0xf]
    %v1507 = vld [vmem:[%s1497 + $0x24] sm:$0xf]
    %v1508 = vld [vmem:[%s1497 + $0x28] sm:$0xf]
    %v1509 = vld [vmem:[%s1497 + $0x2c] sm:$0xf]
    %v1510 = vld [vmem:[%s1497 + $0x30] sm:$0xf]
    %v1511 = vld [vmem:[%s1497 + $0x34] sm:$0xf]
    %v1512 = vld [vmem:[%s1497 + $0x38] sm:$0xf]
    %v1513 = vld [vmem:[%s1497 + $0x3c] sm:$0xf]
    %v1530 = vunpack.c.l.b16 %v1498
    %v1531 = vunpack.c.l.b16 %v1499
    %v1532 = vunpack.c.l.b16 %v1500
    %v1533 = vunpack.c.l.b16 %v1501
    %v1534 = vunpack.c.l.b16 %v1502
    %v1535 = vunpack.c.l.b16 %v1503
    %v1536 = vunpack.c.l.b16 %v1504
    %v1537 = vunpack.c.l.b16 %v1505
    %v1538 = vunpack.c.l.b16 %v1506
    %v1539 = vunpack.c.l.b16 %v1507
    %v1540 = vunpack.c.l.b16 %v1508
    %v1541 = vunpack.c.l.b16 %v1509
    %v1542 = vunpack.c.l.b16 %v1510
    %v1543 = vunpack.c.l.b16 %v1511
    %v1544 = vunpack.c.l.b16 %v1512
    %v1545 = vunpack.c.l.b16 %v1513
    %v1546 = vpack.c.b16 %v1531, %v1530
    %v1547 = vpack.c.b16 %v1533, %v1532
    %v1548 = vpack.c.b16 %v1535, %v1534
    %v1549 = vpack.c.b16 %v1537, %v1536
    %v1550 = vpack.c.b16 %v1539, %v1538
    %v1551 = vpack.c.b16 %v1541, %v1540
    %v1552 = vpack.c.b16 %v1543, %v1542
    %v1553 = vpack.c.b16 %v1545, %v1544
    %1562 = vmatprep.subr.bf16.mxu0 0
    %1563 = vmatpush1.bf16.msra.mxu0 %v1546
    %1564 = vmatprep.subr.bf16.mxu0 0
    %1565 = vmatpush1.bf16.msra.mxu0 %v1547
    %1566 = vmatprep.subr.bf16.mxu0 0
    %1567 = vmatpush1.bf16.msra.mxu0 %v1548
    %1568 = vmatprep.subr.bf16.mxu0 0
    %1569 = vmatpush1.bf16.msra.mxu0 %v1549
    %1570 = vmatprep.subr.bf16.mxu0 0
    %1571 = vmatpush1.bf16.msra.mxu0 %v1550
    %1572 = vmatprep.subr.bf16.mxu0 0
    %1573 = vmatpush1.bf16.msra.mxu0 %v1551
    %1574 = vmatprep.subr.bf16.mxu0 0
    %1575 = vmatpush1.bf16.msra.mxu0 %v1552
    %1576 = vmatprep.subr.bf16.mxu0 0
    %1577 = vmatpush1.bf16.msra.mxu0 %v1553
    %1578 = vmatprep.subr.bf16.mxu0 0
    %1579 = vmatpush1.bf16.msra.mxu0 0
    %1580 = vmatprep.subr.bf16.mxu0 0
    %1581 = vmatpush1.bf16.msra.mxu0 0
    %1582 = vmatprep.subr.bf16.mxu0 0
    %1583 = vmatpush1.bf16.msra.mxu0 0
    %1584 = vmatprep.subr.bf16.mxu0 0
    %1585 = vmatpush1.bf16.msra.mxu0 0
    %1586 = vmatprep.subr.bf16.mxu0 0
    %1587 = vmatpush1.bf16.msra.mxu0 0
    %1588 = vmatprep.subr.bf16.mxu0 0
    %1589 = vmatpush1.bf16.msra.mxu0 0
    %1590 = vmatprep.subr.bf16.mxu0 0
    %1591 = vmatpush1.bf16.msra.mxu0 0
    %1592 = vmatprep.subr.bf16.mxu0 0
    %1593 = vmatpush1.bf16.msra.mxu0 0
    %1594 = vmatprep.mubr.bf16.mxu0 0
    %1595 = vmatmul.mubr.bf16.gmra.mrb[0].mxu0 %v1496
    %v1596 = vpop.f32.mrb[0].mxu0
    %v1597 = vadd.f32 %v1491, %v1596
    %v1598 = vpop.f32.mrb[0].mxu0
    %v1599 = vpop.f32.mrb[0].mxu0
    %v1600 = vpop.f32.mrb[0].mxu0
    %1601 = vdwg.mxu0
    %vm1602 = vcmp.gt.f32.partialorder %v1597, 0.0
    %v1603 = vmin.f32 %v1597, 0.0
    %v1604 = vmul.f32 %v1603, 1.442695
    %v1605 = vpow.pop %v1604
    %v1606 = vsub.f32 %v1605, 1.0
    %v1607 = vsel %vm1602, %v1597, %v1606
    %s1608 = scalar_lea.vmem [#allocation10], 24
    %v1609 = vld [vmem:[%s1608] sm:$0xff]
    %v1611 = vsel %vm484, %v1609, 0
    %1613 = vmatprep.subr.mxu0 0.0
    %1614 = vmatpush1.msra.mxu0 %v1607
    %1615 = vmatprep.subr.mxu0 0.0
    %1616 = vmatpush1.msra.mxu0 0.0
    %1617 = vmatprep.subr.mxu0 0.0
    %1618 = vmatpush1.msra.mxu0 0.0
    %1619 = vmatprep.subr.mxu0 0.0
    %1620 = vmatpush1.msra.mxu0 0.0
    %1621 = vmatprep.subr.mxu0 0.0
    %1622 = vmatpush1.msra.mxu0 0.0
    %1623 = vmatprep.subr.mxu0 0.0
    %1624 = vmatpush1.msra.mxu0 0.0
    %1625 = vmatprep.subr.mxu0 0.0
    %1626 = vmatpush1.msra.mxu0 0.0
    %1627 = vmatprep.subr.mxu0 0.0
    %1628 = vmatpush1.msra.mxu0 0.0
    %1629 = vmatprep.subr.mxu0 0.0
    %1630 = vmatpush1.msra.mxu0 0.0
    %1631 = vmatprep.subr.mxu0 0.0
    %1632 = vmatpush1.msra.mxu0 0.0
    %1633 = vmatprep.subr.mxu0 0.0
    %1634 = vmatpush1.msra.mxu0 0.0
    %1635 = vmatprep.subr.mxu0 0.0
    %1636 = vmatpush1.msra.mxu0 0.0
    %1637 = vmatprep.subr.mxu0 0.0
    %1638 = vmatpush1.msra.mxu0 0.0
    %1639 = vmatprep.subr.mxu0 0.0
    %1640 = vmatpush1.msra.mxu0 0.0
    %1641 = vmatprep.subr.mxu0 0.0
    %1642 = vmatpush1.msra.mxu0 0.0
    %1643 = vmatprep.subr.mxu0 0.0
    %1644 = vmatpush1.msra.mxu0 0.0
    %1645 = vmatprep.subr.mxu0 0.0
    %1646 = vmatpush1.msra.mxu0 0.0
    %1647 = vmatprep.subr.mxu0 0.0
    %1648 = vmatpush1.msra.mxu0 0.0
    %1649 = vmatprep.subr.mxu0 0.0
    %1650 = vmatpush1.msra.mxu0 0.0
    %1651 = vmatprep.subr.mxu0 0.0
    %1652 = vmatpush1.msra.mxu0 0.0
    %1653 = vmatprep.subr.mxu0 0.0
    %1654 = vmatpush1.msra.mxu0 0.0
    %1655 = vmatprep.subr.mxu0 0.0
    %1656 = vmatpush1.msra.mxu0 0.0
    %1657 = vmatprep.subr.mxu0 0.0
    %1658 = vmatpush1.msra.mxu0 0.0
    %1659 = vmatprep.subr.mxu0 0.0
    %1660 = vmatpush1.msra.mxu0 0.0
    %1661 = vmatprep.subr.mxu0 0.0
    %1662 = vmatpush1.msra.mxu0 0.0
    %1663 = vmatprep.subr.mxu0 0.0
    %1664 = vmatpush1.msra.mxu0 0.0
    %1665 = vmatprep.subr.mxu0 0.0
    %1666 = vmatpush1.msra.mxu0 0.0
    %1667 = vmatprep.subr.mxu0 0.0
    %1668 = vmatpush1.msra.mxu0 0.0
    %1669 = vmatprep.subr.mxu0 0.0
    %1670 = vmatpush1.msra.mxu0 0.0
    %1671 = vmatprep.subr.mxu0 0.0
    %1672 = vmatpush1.msra.mxu0 0.0
    %1673 = vmatprep.subr.mxu0 0.0
    %1674 = vmatpush1.msra.mxu0 0.0
    %1675 = vmatprep.subr.mxu0 0.0
    %1676 = vmatpush1.msra.mxu0 0.0
    %1677 = vmatprep.mubr.f32.mxu0 0.0
    %1678 = vmatmul.mubr.f32.gmra.mrb[0].mxu0 %v1611
    %v1679 = vpop.f32.mrb[0].mxu0
    %v1680 = vadd.f32 0.0, %v1679
    %v1681 = vpop.f32.mrb[0].mxu0
    %1682 = vdwg.mxu0
    %v1683 = vld [vmem:[#allocation7] sm:$0xff]
    %v1684 = vpack.c.bf16 %v1683, %v1683
    %v1685 = vld [vmem:[%s8] sm:$0xff]
    %vm1686 = vcmask 261120
    %v1688 = vsel %vm1686, %v1685, 0
    %1690 = vmatprep.subr.mxu0 0.0
    %1691 = vmatpush1.msra.mxu0 %v555
    %1692 = vmatprep.subr.mxu0 0.0
    %1693 = vmatpush1.msra.mxu0 %v930
    %1694 = vmatprep.subr.mxu0 0.0
    %1695 = vmatpush1.msra.mxu0 %v1305
    %1696 = vmatprep.subr.mxu0 0.0
    %1697 = vmatpush1.msra.mxu0 %v1680
    %1698 = vmatprep.subr.mxu0 0.0
    %1699 = vmatpush1.msra.mxu0 0.0
    %1700 = vmatprep.subr.mxu0 0.0
    %1701 = vmatpush1.msra.mxu0 0.0
    %1702 = vmatprep.subr.mxu0 0.0
    %1703 = vmatpush1.msra.mxu0 0.0
    %1704 = vmatprep.subr.mxu0 0.0
    %1705 = vmatpush1.msra.mxu0 0.0
    %1706 = vmatprep.subr.mxu0 0.0
    %1707 = vmatpush1.msra.mxu0 0.0
    %1708 = vmatprep.subr.mxu0 0.0
    %1709 = vmatpush1.msra.mxu0 0.0
    %1710 = vmatprep.subr.mxu0 0.0
    %1711 = vmatpush1.msra.mxu0 0.0
    %1712 = vmatprep.subr.mxu0 0.0
    %1713 = vmatpush1.msra.mxu0 0.0
    %1714 = vmatprep.subr.mxu0 0.0
    %1715 = vmatpush1.msra.mxu0 0.0
    %1716 = vmatprep.subr.mxu0 0.0
    %1717 = vmatpush1.msra.mxu0 0.0
    %1718 = vmatprep.subr.mxu0 0.0
    %1719 = vmatpush1.msra.mxu0 0.0
    %1720 = vmatprep.subr.mxu0 0.0
    %1721 = vmatpush1.msra.mxu0 0.0
    %1722 = vmatprep.subr.mxu0 0.0
    %1723 = vmatpush1.msra.mxu0 0.0
    %1724 = vmatprep.subr.mxu0 0.0
    %1725 = vmatpush1.msra.mxu0 0.0
    %1726 = vmatprep.subr.mxu0 0.0
    %1727 = vmatpush1.msra.mxu0 0.0
    %1728 = vmatprep.subr.mxu0 0.0
    %1729 = vmatpush1.msra.mxu0 0.0
    %1730 = vmatprep.subr.mxu0 0.0
    %1731 = vmatpush1.msra.mxu0 0.0
    %1732 = vmatprep.subr.mxu0 0.0
    %1733 = vmatpush1.msra.mxu0 0.0
    %1734 = vmatprep.subr.mxu0 0.0
    %1735 = vmatpush1.msra.mxu0 0.0
    %1736 = vmatprep.subr.mxu0 0.0
    %1737 = vmatpush1.msra.mxu0 0.0
    %1738 = vmatprep.subr.mxu0 0.0
    %1739 = vmatpush1.msra.mxu0 0.0
    %1740 = vmatprep.subr.mxu0 0.0
    %1741 = vmatpush1.msra.mxu0 0.0
    %1742 = vmatprep.subr.mxu0 0.0
    %1743 = vmatpush1.msra.mxu0 0.0
    %1744 = vmatprep.subr.mxu0 0.0
    %1745 = vmatpush1.msra.mxu0 0.0
    %1746 = vmatprep.subr.mxu0 0.0
    %1747 = vmatpush1.msra.mxu0 0.0
    %1748 = vmatprep.subr.mxu0 0.0
    %1749 = vmatpush1.msra.mxu0 0.0
    %1750 = vmatprep.subr.mxu0 0.0
    %1751 = vmatpush1.msra.mxu0 0.0
    %1752 = vmatprep.subr.mxu0 0.0
    %1753 = vmatpush1.msra.mxu0 0.0
    %1754 = vmatprep.mubr.f32.mxu0 0.0
    %1755 = vmatmul.mubr.f32.gmra.mrb[0].mxu0 %v1688
    %v1756 = vpop.f32.mrb[0].mxu0
    %v1757 = vadd.f32 0.0, %v1756
    %v1758 = vpop.f32.mrb[0].mxu0
    %1759 = vdwg.mxu0
    %v1760 = vld [vmem:[#allocation17] sm:$0xff]
    %v1761 = vld [vmem:[#allocation17 + $0x8] sm:$0xff]
    %v1762 = vld [vmem:[#allocation17 + $0x10] sm:$0xff]
    %v1763 = vld [vmem:[#allocation17 + $0x18] sm:$0xff]
    %v1764 = vld [vmem:[#allocation17 + $0x20] sm:$0xff]
    %v1765 = vld [vmem:[#allocation17 + $0x28] sm:$0xff]
    %v1766 = vld [vmem:[#allocation17 + $0x30] sm:$0xff]
    %v1767 = vld [vmem:[#allocation17 + $0x38] sm:$0xff]
    %v1768 = vld [vmem:[#allocation17 + $0x40] sm:$0xff]
    %v1769 = vld [vmem:[#allocation17 + $0x48] sm:$0xff]
    %v1770 = vld [vmem:[#allocation17 + $0x50] sm:$0xff]
    %v1771 = vld [vmem:[#allocation17 + $0x58] sm:$0xff]
    %v1772 = vld [vmem:[#allocation17 + $0x60] sm:$0xff]
    %v1773 = vld [vmem:[#allocation17 + $0x68] sm:$0xff]
    %v1774 = vld [vmem:[#allocation17 + $0x70] sm:$0xff]
    %v1775 = vld [vmem:[#allocation17 + $0x78] sm:$0xff]
    %v1776 = vld [vmem:[%s12] sm:$0x3]
    %v1778 = vlaneseq
    %v1779 = vshrl.u32 %v1778, 7
    %v1780 = vsub.s32 0, %v1779
    %v1781 = vrot.slane %v1776, %v1780
    %v1782 = vlaneseq
    %v1783 = vshrl.u32 %v1782, 7
    %v1784 = vsub.s32 1, %v1783
    %v1785 = vrot.slane %v1776, %v1784
    %v1804 = vunpack.c.l.b16 %v1760
    %v1805 = vunpack.c.h.b16 %v1760
    %v1806 = vunpack.c.l.b16 %v1761
    %v1807 = vunpack.c.h.b16 %v1761
    %v1808 = vunpack.c.l.b16 %v1762
    %v1809 = vunpack.c.h.b16 %v1762
    %v1810 = vunpack.c.l.b16 %v1763
    %v1811 = vunpack.c.h.b16 %v1763
    %v1812 = vunpack.c.l.b16 %v1764
    %v1813 = vunpack.c.h.b16 %v1764
    %v1814 = vunpack.c.l.b16 %v1765
    %v1815 = vunpack.c.h.b16 %v1765
    %v1816 = vunpack.c.l.b16 %v1766
    %v1817 = vunpack.c.h.b16 %v1766
    %v1818 = vunpack.c.l.b16 %v1767
    %v1819 = vunpack.c.h.b16 %v1767
    %v1820 = vunpack.c.l.b16 %v1768
    %v1821 = vunpack.c.h.b16 %v1768
    %v1822 = vunpack.c.l.b16 %v1769
    %v1823 = vunpack.c.h.b16 %v1769
    %v1824 = vunpack.c.l.b16 %v1770
    %v1825 = vunpack.c.h.b16 %v1770
    %v1826 = vunpack.c.l.b16 %v1771
    %v1827 = vunpack.c.h.b16 %v1771
    %v1828 = vunpack.c.l.b16 %v1772
    %v1829 = vunpack.c.h.b16 %v1772
    %v1830 = vunpack.c.l.b16 %v1773
    %v1831 = vunpack.c.h.b16 %v1773
    %v1832 = vunpack.c.l.b16 %v1774
    %v1833 = vunpack.c.h.b16 %v1774
    %v1834 = vunpack.c.l.b16 %v1775
    %v1835 = vunpack.c.h.b16 %v1775
    %v1836 = vpack.c.b16 %v1806, %v1804
    %v1837 = vpack.c.b16 %v1807, %v1805
    %v1838 = vpack.c.b16 %v1810, %v1808
    %v1839 = vpack.c.b16 %v1811, %v1809
    %v1840 = vpack.c.b16 %v1814, %v1812
    %v1841 = vpack.c.b16 %v1815, %v1813
    %v1842 = vpack.c.b16 %v1818, %v1816
    %v1843 = vpack.c.b16 %v1819, %v1817
    %v1844 = vpack.c.b16 %v1822, %v1820
    %v1845 = vpack.c.b16 %v1823, %v1821
    %v1846 = vpack.c.b16 %v1826, %v1824
    %v1847 = vpack.c.b16 %v1827, %v1825
    %v1848 = vpack.c.b16 %v1830, %v1828
    %v1849 = vpack.c.b16 %v1831, %v1829
    %v1850 = vpack.c.b16 %v1834, %v1832
    %v1851 = vpack.c.b16 %v1835, %v1833
    %1868 = vmatprep.subr.bf16.mxu0 %v1837
    %1869 = vmatpush1.bf16.msra.mxu0 %v1836
    %1870 = vmatprep.subr.bf16.mxu0 %v1839
    %1871 = vmatpush1.bf16.msra.mxu0 %v1838
    %1872 = vmatprep.subr.bf16.mxu0 %v1841
    %1873 = vmatpush1.bf16.msra.mxu0 %v1840
    %1874 = vmatprep.subr.bf16.mxu0 %v1843
    %1875 = vmatpush1.bf16.msra.mxu0 %v1842
    %1876 = vmatprep.subr.bf16.mxu0 %v1845
    %1877 = vmatpush1.bf16.msra.mxu0 %v1844
    %1878 = vmatprep.subr.bf16.mxu0 %v1847
    %1879 = vmatpush1.bf16.msra.mxu0 %v1846
    %1880 = vmatprep.subr.bf16.mxu0 %v1849
    %1881 = vmatpush1.bf16.msra.mxu0 %v1848
    %1882 = vmatprep.subr.bf16.mxu0 %v1851
    %1883 = vmatpush1.bf16.msra.mxu0 %v1850
    %1884 = vmatprep.subr.bf16.mxu0 0
    %1885 = vmatpush1.bf16.msra.mxu0 0
    %1886 = vmatprep.subr.bf16.mxu0 0
    %1887 = vmatpush1.bf16.msra.mxu0 0
    %1888 = vmatprep.subr.bf16.mxu0 0
    %1889 = vmatpush1.bf16.msra.mxu0 0
    %1890 = vmatprep.subr.bf16.mxu0 0
    %1891 = vmatpush1.bf16.msra.mxu0 0
    %1892 = vmatprep.subr.bf16.mxu0 0
    %1893 = vmatpush1.bf16.msra.mxu0 0
    %1894 = vmatprep.subr.bf16.mxu0 0
    %1895 = vmatpush1.bf16.msra.mxu0 0
    %1896 = vmatprep.subr.bf16.mxu0 0
    %1897 = vmatpush1.bf16.msra.mxu0 0
    %1898 = vmatprep.subr.bf16.mxu0 0
    %1899 = vmatpush1.bf16.msra.mxu0 0
    %1900 = vmatprep.mubr.bf16.mxu0 0
    %1901 = vmatmul.mubr.bf16.gmra.mrb[0].mxu0 %v1684
    %v1902 = vpop.f32.mrb[0].mxu0
    %v1903 = vadd.f32 %v1781, %v1902
    %v1904 = vpop.f32.mrb[0].mxu0
    %v1905 = vadd.f32 %v1785, %v1904
    %v1906 = vpop.f32.mrb[0].mxu0
    %v1907 = vpop.f32.mrb[0].mxu0
    %1908 = vdwg.mxu0
    %v1909 = vpack.c.bf16 %v1757, %v1757
    %v1910 = vld [vmem:[#allocation16] sm:$0xff]
    %v1911 = vld [vmem:[#allocation16 + $0x8] sm:$0xff]
    %v1912 = vld [vmem:[#allocation16 + $0x10] sm:$0xff]
    %v1913 = vld [vmem:[#allocation16 + $0x18] sm:$0xff]
    %v1914 = vld [vmem:[#allocation16 + $0x20] sm:$0xff]
    %v1915 = vld [vmem:[#allocation16 + $0x28] sm:$0xff]
    %v1916 = vld [vmem:[#allocation16 + $0x30] sm:$0xff]
    %v1917 = vld [vmem:[#allocation16 + $0x38] sm:$0xff]
    %v1918 = vld [vmem:[#allocation16 + $0x40] sm:$0xff]
    %v1919 = vld [vmem:[#allocation16 + $0x48] sm:$0xff]
    %v1920 = vld [vmem:[#allocation16 + $0x50] sm:$0xff]
    %v1921 = vld [vmem:[#allocation16 + $0x58] sm:$0xff]
    %v1922 = vld [vmem:[#allocation16 + $0x60] sm:$0xff]
    %v1923 = vld [vmem:[#allocation16 + $0x68] sm:$0xff]
    %v1924 = vld [vmem:[#allocation16 + $0x70] sm:$0xff]
    %v1925 = vld [vmem:[#allocation16 + $0x78] sm:$0xff]
    %v1942 = vunpack.c.l.b16 %v1910
    %v1943 = vunpack.c.h.b16 %v1910
    %v1944 = vunpack.c.l.b16 %v1911
    %v1945 = vunpack.c.h.b16 %v1911
    %v1946 = vunpack.c.l.b16 %v1912
    %v1947 = vunpack.c.h.b16 %v1912
    %v1948 = vunpack.c.l.b16 %v1913
    %v1949 = vunpack.c.h.b16 %v1913
    %v1950 = vunpack.c.l.b16 %v1914
    %v1951 = vunpack.c.h.b16 %v1914
    %v1952 = vunpack.c.l.b16 %v1915
    %v1953 = vunpack.c.h.b16 %v1915
    %v1954 = vunpack.c.l.b16 %v1916
    %v1955 = vunpack.c.h.b16 %v1916
    %v1956 = vunpack.c.l.b16 %v1917
    %v1957 = vunpack.c.h.b16 %v1917
    %v1958 = vunpack.c.l.b16 %v1918
    %v1959 = vunpack.c.h.b16 %v1918
    %v1960 = vunpack.c.l.b16 %v1919
    %v1961 = vunpack.c.h.b16 %v1919
    %v1962 = vunpack.c.l.b16 %v1920
    %v1963 = vunpack.c.h.b16 %v1920
    %v1964 = vunpack.c.l.b16 %v1921
    %v1965 = vunpack.c.h.b16 %v1921
    %v1966 = vunpack.c.l.b16 %v1922
    %v1967 = vunpack.c.h.b16 %v1922
    %v1968 = vunpack.c.l.b16 %v1923
    %v1969 = vunpack.c.h.b16 %v1923
    %v1970 = vunpack.c.l.b16 %v1924
    %v1971 = vunpack.c.h.b16 %v1924
    %v1972 = vunpack.c.l.b16 %v1925
    %v1973 = vunpack.c.h.b16 %v1925
    %v1974 = vpack.c.b16 %v1944, %v1942
    %v1975 = vpack.c.b16 %v1945, %v1943
    %v1976 = vpack.c.b16 %v1948, %v1946
    %v1977 = vpack.c.b16 %v1949, %v1947
    %v1978 = vpack.c.b16 %v1952, %v1950
    %v1979 = vpack.c.b16 %v1953, %v1951
    %v1980 = vpack.c.b16 %v1956, %v1954
    %v1981 = vpack.c.b16 %v1957, %v1955
    %v1982 = vpack.c.b16 %v1960, %v1958
    %v1983 = vpack.c.b16 %v1961, %v1959
    %v1984 = vpack.c.b16 %v1964, %v1962
    %v1985 = vpack.c.b16 %v1965, %v1963
    %v1986 = vpack.c.b16 %v1968, %v1966
    %v1987 = vpack.c.b16 %v1969, %v1967
    %v1988 = vpack.c.b16 %v1972, %v1970
    %v1989 = vpack.c.b16 %v1973, %v1971
    %2006 = vmatprep.subr.bf16.mxu0 %v1975
    %2007 = vmatpush1.bf16.msra.mxu0 %v1974
    %2008 = vmatprep.subr.bf16.mxu0 %v1977
    %2009 = vmatpush1.bf16.msra.mxu0 %v1976
    %2010 = vmatprep.subr.bf16.mxu0 %v1979
    %2011 = vmatpush1.bf16.msra.mxu0 %v1978
    %2012 = vmatprep.subr.bf16.mxu0 %v1981
    %2013 = vmatpush1.bf16.msra.mxu0 %v1980
    %2014 = vmatprep.subr.bf16.mxu0 %v1983
    %2015 = vmatpush1.bf16.msra.mxu0 %v1982
    %2016 = vmatprep.subr.bf16.mxu0 %v1985
    %2017 = vmatpush1.bf16.msra.mxu0 %v1984
    %2018 = vmatprep.subr.bf16.mxu0 %v1987
    %2019 = vmatpush1.bf16.msra.mxu0 %v1986
    %2020 = vmatprep.subr.bf16.mxu0 %v1989
    %2021 = vmatpush1.bf16.msra.mxu0 %v1988
    %2022 = vmatprep.subr.bf16.mxu0 0
    %2023 = vmatpush1.bf16.msra.mxu0 0
    %2024 = vmatprep.subr.bf16.mxu0 0
    %2025 = vmatpush1.bf16.msra.mxu0 0
    %2026 = vmatprep.subr.bf16.mxu0 0
    %2027 = vmatpush1.bf16.msra.mxu0 0
    %2028 = vmatprep.subr.bf16.mxu0 0
    %2029 = vmatpush1.bf16.msra.mxu0 0
    %2030 = vmatprep.subr.bf16.mxu0 0
    %2031 = vmatpush1.bf16.msra.mxu0 0
    %2032 = vmatprep.subr.bf16.mxu0 0
    %2033 = vmatpush1.bf16.msra.mxu0 0
    %2034 = vmatprep.subr.bf16.mxu0 0
    %2035 = vmatpush1.bf16.msra.mxu0 0
    %2036 = vmatprep.subr.bf16.mxu0 0
    %2037 = vmatpush1.bf16.msra.mxu0 0
    %2038 = vmatprep.mubr.bf16.mxu0 0
    %2039 = vmatmul.mubr.bf16.gmra.mrb[0].mxu0 %v1909
    %v2040 = vpop.f32.mrb[0].mxu0
    %v2041 = vadd.f32 %v1903, %v2040
    %v2042 = vpop.f32.mrb[0].mxu0
    %v2043 = vadd.f32 %v1905, %v2042
    %v2044 = vpop.f32.mrb[0].mxu0
    %v2045 = vpop.f32.mrb[0].mxu0
    %2046 = vdwg.mxu0
    %vm2047 = vcmp.gt.f32.partialorder %v2041, 0.0
    %v2048 = vmin.f32 %v2041, 0.0
    %v2049 = vmul.f32 %v2048, 1.442695
    %v2050 = vpow.pop %v2049
    %v2051 = vsub.f32 %v2050, 1.0
    %v2052 = vsel %vm2047, %v2041, %v2051
    %v2053 = vxor.u32 %v2043, 2147483648
    %v2054 = vmul.f32 %v2053, 1.442695
    %v2055 = vpow.pop %v2054
    %v2056 = vadd.f32 %v2055, 1.0
    %v2057 = vrcp.pop %v2056
    %v2058 = vmul.f32 1.0, %v2057
    %v2059 = vmul.f32 %v2052, %v2058
    %v2060 = vld [vmem:[%s9] sm:$0xff]
    %v2062 = vsel %vm484, %v2060, 0
    %2064 = vmatprep.subr.mxu0 0.0
    %2065 = vmatpush1.msra.mxu0 %v2059
    %2066 = vmatprep.subr.mxu0 0.0
    %2067 = vmatpush1.msra.mxu0 0.0
    %2068 = vmatprep.subr.mxu0 0.0
    %2069 = vmatpush1.msra.mxu0 0.0
    %2070 = vmatprep.subr.mxu0 0.0
    %2071 = vmatpush1.msra.mxu0 0.0
    %2072 = vmatprep.subr.mxu0 0.0
    %2073 = vmatpush1.msra.mxu0 0.0
    %2074 = vmatprep.subr.mxu0 0.0
    %2075 = vmatpush1.msra.mxu0 0.0
    %2076 = vmatprep.subr.mxu0 0.0
    %2077 = vmatpush1.msra.mxu0 0.0
    %2078 = vmatprep.subr.mxu0 0.0
    %2079 = vmatpush1.msra.mxu0 0.0
    %2080 = vmatprep.subr.mxu0 0.0
    %2081 = vmatpush1.msra.mxu0 0.0
    %2082 = vmatprep.subr.mxu0 0.0
    %2083 = vmatpush1.msra.mxu0 0.0
    %2084 = vmatprep.subr.mxu0 0.0
    %2085 = vmatpush1.msra.mxu0 0.0
    %2086 = vmatprep.subr.mxu0 0.0
    %2087 = vmatpush1.msra.mxu0 0.0
    %2088 = vmatprep.subr.mxu0 0.0
    %2089 = vmatpush1.msra.mxu0 0.0
    %2090 = vmatprep.subr.mxu0 0.0
    %2091 = vmatpush1.msra.mxu0 0.0
    %2092 = vmatprep.subr.mxu0 0.0
    %2093 = vmatpush1.msra.mxu0 0.0
    %2094 = vmatprep.subr.mxu0 0.0
    %2095 = vmatpush1.msra.mxu0 0.0
    %2096 = vmatprep.subr.mxu0 0.0
    %2097 = vmatpush1.msra.mxu0 0.0
    %2098 = vmatprep.subr.mxu0 0.0
    %2099 = vmatpush1.msra.mxu0 0.0
    %2100 = vmatprep.subr.mxu0 0.0
    %2101 = vmatpush1.msra.mxu0 0.0
    %2102 = vmatprep.subr.mxu0 0.0
    %2103 = vmatpush1.msra.mxu0 0.0
    %2104 = vmatprep.subr.mxu0 0.0
    %2105 = vmatpush1.msra.mxu0 0.0
    %2106 = vmatprep.subr.mxu0 0.0
    %2107 = vmatpush1.msra.mxu0 0.0
    %2108 = vmatprep.subr.mxu0 0.0
    %2109 = vmatpush1.msra.mxu0 0.0
    %2110 = vmatprep.subr.mxu0 0.0
    %2111 = vmatpush1.msra.mxu0 0.0
    %2112 = vmatprep.subr.mxu0 0.0
    %2113 = vmatpush1.msra.mxu0 0.0
    %2114 = vmatprep.subr.mxu0 0.0
    %2115 = vmatpush1.msra.mxu0 0.0
    %2116 = vmatprep.subr.mxu0 0.0
    %2117 = vmatpush1.msra.mxu0 0.0
    %2118 = vmatprep.subr.mxu0 0.0
    %2119 = vmatpush1.msra.mxu0 0.0
    %2120 = vmatprep.subr.mxu0 0.0
    %2121 = vmatpush1.msra.mxu0 0.0
    %2122 = vmatprep.subr.mxu0 0.0
    %2123 = vmatpush1.msra.mxu0 0.0
    %2124 = vmatprep.subr.mxu0 0.0
    %2125 = vmatpush1.msra.mxu0 0.0
    %2126 = vmatprep.subr.mxu0 0.0
    %2127 = vmatpush1.msra.mxu0 0.0
    %2128 = vmatprep.mubr.f32.mxu0 0.0
    %2129 = vmatmul.mubr.f32.gmra.mrb[0].mxu0 %v2062
    %v2130 = vpop.f32.mrb[0].mxu0
    %v2131 = vadd.f32 0.0, %v2130
    %v2132 = vpop.f32.mrb[0].mxu0
    %2133 = vdwg.mxu0
    %s2134 = scalar_lea.vmem %s8, 8
    %v2135 = vld [vmem:[%s2134] sm:$0xff]
    %v2137 = vsel %vm1686, %v2135, 0
    %2139 = vmatprep.subr.mxu0 0.0
    %2140 = vmatpush1.msra.mxu0 %v555
    %2141 = vmatprep.subr.mxu0 0.0
    %2142 = vmatpush1.msra.mxu0 %v930
    %2143 = vmatprep.subr.mxu0 0.0
    %2144 = vmatpush1.msra.mxu0 %v1305
    %2145 = vmatprep.subr.mxu0 0.0
    %2146 = vmatpush1.msra.mxu0 %v1680
    %2147 = vmatprep.subr.mxu0 0.0
    %2148 = vmatpush1.msra.mxu0 0.0
    %2149 = vmatprep.subr.mxu0 0.0
    %2150 = vmatpush1.msra.mxu0 0.0
    %2151 = vmatprep.subr.mxu0 0.0
    %2152 = vmatpush1.msra.mxu0 0.0
    %2153 = vmatprep.subr.mxu0 0.0
    %2154 = vmatpush1.msra.mxu0 0.0
    %2155 = vmatprep.subr.mxu0 0.0
    %2156 = vmatpush1.msra.mxu0 0.0
    %2157 = vmatprep.subr.mxu0 0.0
    %2158 = vmatpush1.msra.mxu0 0.0
    %2159 = vmatprep.subr.mxu0 0.0
    %2160 = vmatpush1.msra.mxu0 0.0
    %2161 = vmatprep.subr.mxu0 0.0
    %2162 = vmatpush1.msra.mxu0 0.0
    %2163 = vmatprep.subr.mxu0 0.0
    %2164 = vmatpush1.msra.mxu0 0.0
    %2165 = vmatprep.subr.mxu0 0.0
    %2166 = vmatpush1.msra.mxu0 0.0
    %2167 = vmatprep.subr.mxu0 0.0
    %2168 = vmatpush1.msra.mxu0 0.0
    %2169 = vmatprep.subr.mxu0 0.0
    %2170 = vmatpush1.msra.mxu0 0.0
    %2171 = vmatprep.subr.mxu0 0.0
    %2172 = vmatpush1.msra.mxu0 0.0
    %2173 = vmatprep.subr.mxu0 0.0
    %2174 = vmatpush1.msra.mxu0 0.0
    %2175 = vmatprep.subr.mxu0 0.0
    %2176 = vmatpush1.msra.mxu0 0.0
    %2177 = vmatprep.subr.mxu0 0.0
    %2178 = vmatpush1.msra.mxu0 0.0
    %2179 = vmatprep.subr.mxu0 0.0
    %2180 = vmatpush1.msra.mxu0 0.0
    %2181 = vmatprep.subr.mxu0 0.0
    %2182 = vmatpush1.msra.mxu0 0.0
    %2183 = vmatprep.subr.mxu0 0.0
    %2184 = vmatpush1.msra.mxu0 0.0
    %2185 = vmatprep.subr.mxu0 0.0
    %2186 = vmatpush1.msra.mxu0 0.0
    %2187 = vmatprep.subr.mxu0 0.0
    %2188 = vmatpush1.msra.mxu0 0.0
    %2189 = vmatprep.subr.mxu0 0.0
    %2190 = vmatpush1.msra.mxu0 0.0
    %2191 = vmatprep.subr.mxu0 0.0
    %2192 = vmatpush1.msra.mxu0 0.0
    %2193 = vmatprep.subr.mxu0 0.0
    %2194 = vmatpush1.msra.mxu0 0.0
    %2195 = vmatprep.subr.mxu0 0.0
    %2196 = vmatpush1.msra.mxu0 0.0
    %2197 = vmatprep.subr.mxu0 0.0
    %2198 = vmatpush1.msra.mxu0 0.0
    %2199 = vmatprep.subr.mxu0 0.0
    %2200 = vmatpush1.msra.mxu0 0.0
    %2201 = vmatprep.subr.mxu0 0.0
    %2202 = vmatpush1.msra.mxu0 0.0
    %2203 = vmatprep.mubr.f32.mxu0 0.0
    %2204 = vmatmul.mubr.f32.gmra.mrb[0].mxu0 %v2137
    %v2205 = vpop.f32.mrb[0].mxu0
    %v2206 = vadd.f32 0.0, %v2205
    %v2207 = vpop.f32.mrb[0].mxu0
    %2208 = vdwg.mxu0
    %s2209 = scalar_lea.vmem [#allocation17], 128
    %v2210 = vld [vmem:[%s2209] sm:$0xff]
    %v2211 = vld [vmem:[%s2209 + $0x8] sm:$0xff]
    %v2212 = vld [vmem:[%s2209 + $0x10] sm:$0xff]
    %v2213 = vld [vmem:[%s2209 + $0x18] sm:$0xff]
    %v2214 = vld [vmem:[%s2209 + $0x20] sm:$0xff]
    %v2215 = vld [vmem:[%s2209 + $0x28] sm:$0xff]
    %v2216 = vld [vmem:[%s2209 + $0x30] sm:$0xff]
    %v2217 = vld [vmem:[%s2209 + $0x38] sm:$0xff]
    %v2218 = vld [vmem:[%s2209 + $0x40] sm:$0xff]
    %v2219 = vld [vmem:[%s2209 + $0x48] sm:$0xff]
    %v2220 = vld [vmem:[%s2209 + $0x50] sm:$0xff]
    %v2221 = vld [vmem:[%s2209 + $0x58] sm:$0xff]
    %v2222 = vld [vmem:[%s2209 + $0x60] sm:$0xff]
    %v2223 = vld [vmem:[%s2209 + $0x68] sm:$0xff]
    %v2224 = vld [vmem:[%s2209 + $0x70] sm:$0xff]
    %v2225 = vld [vmem:[%s2209 + $0x78] sm:$0xff]
    %s2226 = scalar_lea.vmem %s12, 2
    %v2227 = vld [vmem:[%s2226] sm:$0x3]
    %v2229 = vlaneseq
    %v2230 = vshrl.u32 %v2229, 7
    %v2231 = vsub.s32 0, %v2230
    %v2232 = vrot.slane %v2227, %v2231
    %v2233 = vlaneseq
    %v2234 = vshrl.u32 %v2233, 7
    %v2235 = vsub.s32 1, %v2234
    %v2236 = vrot.slane %v2227, %v2235
    %v2255 = vunpack.c.l.b16 %v2210
    %v2256 = vunpack.c.h.b16 %v2210
    %v2257 = vunpack.c.l.b16 %v2211
    %v2258 = vunpack.c.h.b16 %v2211
    %v2259 = vunpack.c.l.b16 %v2212
    %v2260 = vunpack.c.h.b16 %v2212
    %v2261 = vunpack.c.l.b16 %v2213
    %v2262 = vunpack.c.h.b16 %v2213
    %v2263 = vunpack.c.l.b16 %v2214
    %v2264 = vunpack.c.h.b16 %v2214
    %v2265 = vunpack.c.l.b16 %v2215
    %v2266 = vunpack.c.h.b16 %v2215
    %v2267 = vunpack.c.l.b16 %v2216
    %v2268 = vunpack.c.h.b16 %v2216
    %v2269 = vunpack.c.l.b16 %v2217
    %v2270 = vunpack.c.h.b16 %v2217
    %v2271 = vunpack.c.l.b16 %v2218
    %v2272 = vunpack.c.h.b16 %v2218
    %v2273 = vunpack.c.l.b16 %v2219
    %v2274 = vunpack.c.h.b16 %v2219
    %v2275 = vunpack.c.l.b16 %v2220
    %v2276 = vunpack.c.h.b16 %v2220
    %v2277 = vunpack.c.l.b16 %v2221
    %v2278 = vunpack.c.h.b16 %v2221
    %v2279 = vunpack.c.l.b16 %v2222
    %v2280 = vunpack.c.h.b16 %v2222
    %v2281 = vunpack.c.l.b16 %v2223
    %v2282 = vunpack.c.h.b16 %v2223
    %v2283 = vunpack.c.l.b16 %v2224
    %v2284 = vunpack.c.h.b16 %v2224
    %v2285 = vunpack.c.l.b16 %v2225
    %v2286 = vunpack.c.h.b16 %v2225
    %v2287 = vpack.c.b16 %v2257, %v2255
    %v2288 = vpack.c.b16 %v2258, %v2256
    %v2289 = vpack.c.b16 %v2261, %v2259
    %v2290 = vpack.c.b16 %v2262, %v2260
    %v2291 = vpack.c.b16 %v2265, %v2263
    %v2292 = vpack.c.b16 %v2266, %v2264
    %v2293 = vpack.c.b16 %v2269, %v2267
    %v2294 = vpack.c.b16 %v2270, %v2268
    %v2295 = vpack.c.b16 %v2273, %v2271
    %v2296 = vpack.c.b16 %v2274, %v2272
    %v2297 = vpack.c.b16 %v2277, %v2275
    %v2298 = vpack.c.b16 %v2278, %v2276
    %v2299 = vpack.c.b16 %v2281, %v2279
    %v2300 = vpack.c.b16 %v2282, %v2280
    %v2301 = vpack.c.b16 %v2285, %v2283
    %v2302 = vpack.c.b16 %v2286, %v2284
    %2319 = vmatprep.subr.bf16.mxu0 %v2288
    %2320 = vmatpush1.bf16.msra.mxu0 %v2287
    %2321 = vmatprep.subr.bf16.mxu0 %v2290
    %2322 = vmatpush1.bf16.msra.mxu0 %v2289
    %2323 = vmatprep.subr.bf16.mxu0 %v2292
    %2324 = vmatpush1.bf16.msra.mxu0 %v2291
    %2325 = vmatprep.subr.bf16.mxu0 %v2294
    %2326 = vmatpush1.bf16.msra.mxu0 %v2293
    %2327 = vmatprep.subr.bf16.mxu0 %v2296
    %2328 = vmatpush1.bf16.msra.mxu0 %v2295
    %2329 = vmatprep.subr.bf16.mxu0 %v2298
    %2330 = vmatpush1.bf16.msra.mxu0 %v2297
    %2331 = vmatprep.subr.bf16.mxu0 %v2300
    %2332 = vmatpush1.bf16.msra.mxu0 %v2299
    %2333 = vmatprep.subr.bf16.mxu0 %v2302
    %2334 = vmatpush1.bf16.msra.mxu0 %v2301
    %2335 = vmatprep.subr.bf16.mxu0 0
    %2336 = vmatpush1.bf16.msra.mxu0 0
    %2337 = vmatprep.subr.bf16.mxu0 0
    %2338 = vmatpush1.bf16.msra.mxu0 0
    %2339 = vmatprep.subr.bf16.mxu0 0
    %2340 = vmatpush1.bf16.msra.mxu0 0
    %2341 = vmatprep.subr.bf16.mxu0 0
    %2342 = vmatpush1.bf16.msra.mxu0 0
    %2343 = vmatprep.subr.bf16.mxu0 0
    %2344 = vmatpush1.bf16.msra.mxu0 0
    %2345 = vmatprep.subr.bf16.mxu0 0
    %2346 = vmatpush1.bf16.msra.mxu0 0
    %2347 = vmatprep.subr.bf16.mxu0 0
    %2348 = vmatpush1.bf16.msra.mxu0 0
    %2349 = vmatprep.subr.bf16.mxu0 0
    %2350 = vmatpush1.bf16.msra.mxu0 0
    %2351 = vmatprep.mubr.bf16.mxu0 0
    %2352 = vmatmul.mubr.bf16.gmra.mrb[0].mxu0 %v1684
    %v2353 = vpop.f32.mrb[0].mxu0
    %v2354 = vadd.f32 %v2232, %v2353
    %v2355 = vpop.f32.mrb[0].mxu0
    %v2356 = vadd.f32 %v2236, %v2355
    %v2357 = vpop.f32.mrb[0].mxu0
    %v2358 = vpop.f32.mrb[0].mxu0
    %2359 = vdwg.mxu0
    %v2360 = vpack.c.bf16 %v2206, %v2206
    %s2361 = scalar_lea.vmem [#allocation16], 128
    %v2362 = vld [vmem:[%s2361] sm:$0xff]
    %v2363 = vld [vmem:[%s2361 + $0x8] sm:$0xff]
    %v2364 = vld [vmem:[%s2361 + $0x10] sm:$0xff]
    %v2365 = vld [vmem:[%s2361 + $0x18] sm:$0xff]
    %v2366 = vld [vmem:[%s2361 + $0x20] sm:$0xff]
    %v2367 = vld [vmem:[%s2361 + $0x28] sm:$0xff]
    %v2368 = vld [vmem:[%s2361 + $0x30] sm:$0xff]
    %v2369 = vld [vmem:[%s2361 + $0x38] sm:$0xff]
    %v2370 = vld [vmem:[%s2361 + $0x40] sm:$0xff]
    %v2371 = vld [vmem:[%s2361 + $0x48] sm:$0xff]
    %v2372 = vld [vmem:[%s2361 + $0x50] sm:$0xff]
    %v2373 = vld [vmem:[%s2361 + $0x58] sm:$0xff]
    %v2374 = vld [vmem:[%s2361 + $0x60] sm:$0xff]
    %v2375 = vld [vmem:[%s2361 + $0x68] sm:$0xff]
    %v2376 = vld [vmem:[%s2361 + $0x70] sm:$0xff]
    %v2377 = vld [vmem:[%s2361 + $0x78] sm:$0xff]
    %v2394 = vunpack.c.l.b16 %v2362
    %v2395 = vunpack.c.h.b16 %v2362
    %v2396 = vunpack.c.l.b16 %v2363
    %v2397 = vunpack.c.h.b16 %v2363
    %v2398 = vunpack.c.l.b16 %v2364
    %v2399 = vunpack.c.h.b16 %v2364
    %v2400 = vunpack.c.l.b16 %v2365
    %v2401 = vunpack.c.h.b16 %v2365
    %v2402 = vunpack.c.l.b16 %v2366
    %v2403 = vunpack.c.h.b16 %v2366
    %v2404 = vunpack.c.l.b16 %v2367
    %v2405 = vunpack.c.h.b16 %v2367
    %v2406 = vunpack.c.l.b16 %v2368
    %v2407 = vunpack.c.h.b16 %v2368
    %v2408 = vunpack.c.l.b16 %v2369
    %v2409 = vunpack.c.h.b16 %v2369
    %v2410 = vunpack.c.l.b16 %v2370
    %v2411 = vunpack.c.h.b16 %v2370
    %v2412 = vunpack.c.l.b16 %v2371
    %v2413 = vunpack.c.h.b16 %v2371
    %v2414 = vunpack.c.l.b16 %v2372
    %v2415 = vunpack.c.h.b16 %v2372
    %v2416 = vunpack.c.l.b16 %v2373
    %v2417 = vunpack.c.h.b16 %v2373
    %v2418 = vunpack.c.l.b16 %v2374
    %v2419 = vunpack.c.h.b16 %v2374
    %v2420 = vunpack.c.l.b16 %v2375
    %v2421 = vunpack.c.h.b16 %v2375
    %v2422 = vunpack.c.l.b16 %v2376
    %v2423 = vunpack.c.h.b16 %v2376
    %v2424 = vunpack.c.l.b16 %v2377
    %v2425 = vunpack.c.h.b16 %v2377
    %v2426 = vpack.c.b16 %v2396, %v2394
    %v2427 = vpack.c.b16 %v2397, %v2395
    %v2428 = vpack.c.b16 %v2400, %v2398
    %v2429 = vpack.c.b16 %v2401, %v2399
    %v2430 = vpack.c.b16 %v2404, %v2402
    %v2431 = vpack.c.b16 %v2405, %v2403
    %v2432 = vpack.c.b16 %v2408, %v2406
    %v2433 = vpack.c.b16 %v2409, %v2407
    %v2434 = vpack.c.b16 %v2412, %v2410
    %v2435 = vpack.c.b16 %v2413, %v2411
    %v2436 = vpack.c.b16 %v2416, %v2414
    %v2437 = vpack.c.b16 %v2417, %v2415
    %v2438 = vpack.c.b16 %v2420, %v2418
    %v2439 = vpack.c.b16 %v2421, %v2419
    %v2440 = vpack.c.b16 %v2424, %v2422
    %v2441 = vpack.c.b16 %v2425, %v2423
    %2458 = vmatprep.subr.bf16.mxu0 %v2427
    %2459 = vmatpush1.bf16.msra.mxu0 %v2426
    %2460 = vmatprep.subr.bf16.mxu0 %v2429
    %2461 = vmatpush1.bf16.msra.mxu0 %v2428
    %2462 = vmatprep.subr.bf16.mxu0 %v2431
    %2463 = vmatpush1.bf16.msra.mxu0 %v2430
    %2464 = vmatprep.subr.bf16.mxu0 %v2433
    %2465 = vmatpush1.bf16.msra.mxu0 %v2432
    %2466 = vmatprep.subr.bf16.mxu0 %v2435
    %2467 = vmatpush1.bf16.msra.mxu0 %v2434
    %2468 = vmatprep.subr.bf16.mxu0 %v2437
    %2469 = vmatpush1.bf16.msra.mxu0 %v2436
    %2470 = vmatprep.subr.bf16.mxu0 %v2439
    %2471 = vmatpush1.bf16.msra.mxu0 %v2438
    %2472 = vmatprep.subr.bf16.mxu0 %v2441
    %2473 = vmatpush1.bf16.msra.mxu0 %v2440
    %2474 = vmatprep.subr.bf16.mxu0 0
    %2475 = vmatpush1.bf16.msra.mxu0 0
    %2476 = vmatprep.subr.bf16.mxu0 0
    %2477 = vmatpush1.bf16.msra.mxu0 0
    %2478 = vmatprep.subr.bf16.mxu0 0
    %2479 = vmatpush1.bf16.msra.mxu0 0
    %2480 = vmatprep.subr.bf16.mxu0 0
    %2481 = vmatpush1.bf16.msra.mxu0 0
    %2482 = vmatprep.subr.bf16.mxu0 0
    %2483 = vmatpush1.bf16.msra.mxu0 0
    %2484 = vmatprep.subr.bf16.mxu0 0
    %2485 = vmatpush1.bf16.msra.mxu0 0
    %2486 = vmatprep.subr.bf16.mxu0 0
    %2487 = vmatpush1.bf16.msra.mxu0 0
    %2488 = vmatprep.subr.bf16.mxu0 0
    %2489 = vmatpush1.bf16.msra.mxu0 0
    %2490 = vmatprep.mubr.bf16.mxu0 0
    %2491 = vmatmul.mubr.bf16.gmra.mrb[0].mxu0 %v2360
    %v2492 = vpop.f32.mrb[0].mxu0
    %v2493 = vadd.f32 %v2354, %v2492
    %v2494 = vpop.f32.mrb[0].mxu0
    %v2495 = vadd.f32 %v2356, %v2494
    %v2496 = vpop.f32.mrb[0].mxu0
    %v2497 = vpop.f32.mrb[0].mxu0
    %2498 = vdwg.mxu0
    %vm2499 = vcmp.gt.f32.partialorder %v2493, 0.0
    %v2500 = vmin.f32 %v2493, 0.0
    %v2501 = vmul.f32 %v2500, 1.442695
    %v2502 = vpow.pop %v2501
    %v2503 = vsub.f32 %v2502, 1.0
    %v2504 = vsel %vm2499, %v2493, %v2503
    %v2505 = vxor.u32 %v2495, 2147483648
    %v2506 = vmul.f32 %v2505, 1.442695
    %v2507 = vpow.pop %v2506
    %v2508 = vadd.f32 %v2507, 1.0
    %v2509 = vrcp.pop %v2508
    %v2510 = vmul.f32 1.0, %v2509
    %v2511 = vmul.f32 %v2504, %v2510
    %s2512 = scalar_lea.vmem %s9, 8
    %v2513 = vld [vmem:[%s2512] sm:$0xff]
    %v2515 = vsel %vm484, %v2513, 0
    %2517 = vmatprep.subr.mxu0 0.0
    %2518 = vmatpush1.msra.mxu0 %v2511
    %2519 = vmatprep.subr.mxu0 0.0
    %2520 = vmatpush1.msra.mxu0 0.0
    %2521 = vmatprep.subr.mxu0 0.0
    %2522 = vmatpush1.msra.mxu0 0.0
    %2523 = vmatprep.subr.mxu0 0.0
    %2524 = vmatpush1.msra.mxu0 0.0
    %2525 = vmatprep.subr.mxu0 0.0
    %2526 = vmatpush1.msra.mxu0 0.0
    %2527 = vmatprep.subr.mxu0 0.0
    %2528 = vmatpush1.msra.mxu0 0.0
    %2529 = vmatprep.subr.mxu0 0.0
    %2530 = vmatpush1.msra.mxu0 0.0
    %2531 = vmatprep.subr.mxu0 0.0
    %2532 = vmatpush1.msra.mxu0 0.0
    %2533 = vmatprep.subr.mxu0 0.0
    %2534 = vmatpush1.msra.mxu0 0.0
    %2535 = vmatprep.subr.mxu0 0.0
    %2536 = vmatpush1.msra.mxu0 0.0
    %2537 = vmatprep.subr.mxu0 0.0
    %2538 = vmatpush1.msra.mxu0 0.0
    %2539 = vmatprep.subr.mxu0 0.0
    %2540 = vmatpush1.msra.mxu0 0.0
    %2541 = vmatprep.subr.mxu0 0.0
    %2542 = vmatpush1.msra.mxu0 0.0
    %2543 = vmatprep.subr.mxu0 0.0
    %2544 = vmatpush1.msra.mxu0 0.0
    %2545 = vmatprep.subr.mxu0 0.0
    %2546 = vmatpush1.msra.mxu0 0.0
    %2547 = vmatprep.subr.mxu0 0.0
    %2548 = vmatpush1.msra.mxu0 0.0
    %2549 = vmatprep.subr.mxu0 0.0
    %2550 = vmatpush1.msra.mxu0 0.0
    %2551 = vmatprep.subr.mxu0 0.0
    %2552 = vmatpush1.msra.mxu0 0.0
    %2553 = vmatprep.subr.mxu0 0.0
    %2554 = vmatpush1.msra.mxu0 0.0
    %2555 = vmatprep.subr.mxu0 0.0
    %2556 = vmatpush1.msra.mxu0 0.0
    %2557 = vmatprep.subr.mxu0 0.0
    %2558 = vmatpush1.msra.mxu0 0.0
    %2559 = vmatprep.subr.mxu0 0.0
    %2560 = vmatpush1.msra.mxu0 0.0
    %2561 = vmatprep.subr.mxu0 0.0
    %2562 = vmatpush1.msra.mxu0 0.0
    %2563 = vmatprep.subr.mxu0 0.0
    %2564 = vmatpush1.msra.mxu0 0.0
    %2565 = vmatprep.subr.mxu0 0.0
    %2566 = vmatpush1.msra.mxu0 0.0
    %2567 = vmatprep.subr.mxu0 0.0
    %2568 = vmatpush1.msra.mxu0 0.0
    %2569 = vmatprep.subr.mxu0 0.0
    %2570 = vmatpush1.msra.mxu0 0.0
    %2571 = vmatprep.subr.mxu0 0.0
    %2572 = vmatpush1.msra.mxu0 0.0
    %2573 = vmatprep.subr.mxu0 0.0
    %2574 = vmatpush1.msra.mxu0 0.0
    %2575 = vmatprep.subr.mxu0 0.0
    %2576 = vmatpush1.msra.mxu0 0.0
    %2577 = vmatprep.subr.mxu0 0.0
    %2578 = vmatpush1.msra.mxu0 0.0
    %2579 = vmatprep.subr.mxu0 0.0
    %2580 = vmatpush1.msra.mxu0 0.0
    %2581 = vmatprep.mubr.f32.mxu0 0.0
    %2582 = vmatmul.mubr.f32.gmra.mrb[0].mxu0 %v2515
    %v2583 = vpop.f32.mrb[0].mxu0
    %v2584 = vadd.f32 0.0, %v2583
    %v2585 = vpop.f32.mrb[0].mxu0
    %2586 = vdwg.mxu0
    %2587 = vst [vmem:[#allocation19] sm:$0xff] %v2131
    %s2588 = scalar_lea.vmem [#allocation19], 8
    %2589 = vst [vmem:[%s2588] sm:$0xff] %v2584
    // Predicated region
    $region94: #{tpu_custom_call.1} parent=1 // pred_check
      _
    $region95: #{tpu_custom_call.1} parent=1 // pred_check_branch
      %2591 = sbr.rel (0) target = $region97
    $region96: #{tpu_custom_call.1} parent=1 // pred_region
      %s2593 = ssub.s32 256, 256
      %2594 = vsyncadd [#allocation4], %s2593
      %s2595 = sshll.u32 [#allocation19], 4
      %s2596 = int_to_ptr.vmem [resolvable:$true] %s2595
      %2601 = dma.vmem_to_hbm [thread:$0]  %s2596, 256, %s13, [#allocation4], 128, 128, 8
    $region97: #{tpu_custom_call.1} parent=1 // pred_fallthru
      _
    // Predicated region
    $region98: #{tpu_custom_call.1} parent=1 // pred_check
      _
    $region99: #{tpu_custom_call.1} parent=1 // pred_check_branch
      %2603 = sbr.rel (0) target = $region101
    $region100: #{tpu_custom_call.1} parent=1 // pred_region
      %2604 = dma.done [#allocation4], 256
    $region101: #{tpu_custom_call.1} parent=1 // pred_fallthru
      _
    %2605 = vsyncpa [#allocation3], 1
    %2606 = vsyncpa [#allocation6], 1
    %2607 = vsyncpa [#allocation9], 1
    %2608 = vsyncpa [#allocation12], 1
    %2609 = vsyncpa [#allocation15], 1
    %2610 = vsyncpa [#allocation18], 1
    %2611 = vsyncpa [#allocation4], 1

</llo_original>
